<compile_context>
chip_gen: v7x
topology: tpu7x:2x2x1
jax: 0.10.0
libtpu: 0.0.40
codegen_flags: <defaults>
</compile_context>

<pallas_src>
import jax
import jax.numpy as jnp
from jax.experimental import pallas as pl
from jax.experimental.pallas import tpu as pltpu

HIDDEN = 192   # hidden_dim from the module
SEQ = 360      # 360 LiDAR beams -> 360 timesteps
OUT = 3        # pos_x, pos_y, orientation_z
UNROLL = 4     # manual unroll of the recurrence (largest value without vreg spills)


def _gate_pad(h):
    """Pad a gate width up to a multiple of 128 lanes (192 -> 256)."""
    return ((h + 127) // 128) * 128


def lstm_kernel(xw_ref, w_hh_ref, fcw_ref, fcb_ref, out_ref):
    """Single-invocation kernel: the whole sequence recurrence runs inside.

    xw_ref  : (T, B, 4*Hp) bf16  precomputed x_t * w_ih + (b_ih + b_hh),
                                 gate order (i, f, o, g), zero-padded lanes
    w_hh_ref: (Hp, 4*Hp)   bf16  fused recurrent weights, pre-transposed so the
                                 recurrence is `h @ W`; padded rows/cols are zero
    fcw_ref : (Hp, O)      f32   fc weight (transposed, zero-padded rows)
    fcb_ref : (1, O)       f32   fc bias
    out_ref : (B, O)       f32
    """
    T, B, _ = xw_ref.shape
    Hp = w_hh_ref.shape[0]

    def sigmoid_t(z):
        # sigmoid(z) == 0.5 * (tanh(0.5*z) + 1): one native EUP op + cheap VPU work.
        return 0.5 * jnp.tanh(0.5 * z) + 0.5

    def step(t, carry):
        h, c = carry
        # bf16 MXU operands, f32 accumulate; W_hh read straight from its VMEM ref.
        pre = xw_ref[t].astype(jnp.float32) + jnp.dot(
            h.astype(jnp.bfloat16), w_hh_ref[...],
            preferred_element_type=jnp.float32)
        # Gate order (i, f, o, g): sigmoid gates are contiguous -> one 6-vreg
        # EUP stream; the candidate gate g gets its own 2-vreg tanh.
        sig = sigmoid_t(pre[:, :3 * Hp])
        i_g = sig[:, 0 * Hp:1 * Hp]
        f_g = sig[:, 1 * Hp:2 * Hp]
        o_g = sig[:, 2 * Hp:3 * Hp]
        g_g = jnp.tanh(pre[:, 3 * Hp:])
        c_new = f_g * c + i_g * g_g                        # padded lanes stay 0
        h_new = o_g * jnp.tanh(c_new)                      # padded lanes stay 0
        return h_new, c_new

    h0 = jnp.zeros((B, Hp), jnp.float32)
    c0 = jnp.zeros((B, Hp), jnp.float32)

    n_main = T // UNROLL

    def unrolled_step(s, carry):
        t0 = s * UNROLL
        for u in range(UNROLL):                            # static inline unroll
            carry = step(t0 + u, carry)
        return carry

    carry = jax.lax.fori_loop(0, n_main, unrolled_step, (h0, c0))
    if n_main * UNROLL < T:                                # static tail (T % UNROLL)
        carry = jax.lax.fori_loop(n_main * UNROLL, T, step, carry)
    h, _ = carry

    out_ref[...] = (
        jnp.dot(h, fcw_ref[...], preferred_element_type=jnp.float32) + fcb_ref[...]
    ).astype(out_ref.dtype)


def lstm_net_forward(x, w_ih, w_hh, b_ih, b_hh, fc_w, fc_b):
    """x: (B, 360) f32 -> (B, 3) f32.  Parameter shapes follow nn.LSTM / nn.Linear."""
    B, T = x.shape
    H = w_hh.shape[1]
    O = fc_w.shape[0]
    Hp = _gate_pad(H)

    f32 = jnp.float32
    bf16 = jnp.bfloat16

    # ---- Glue: repack PyTorch-layout parameters into the fused, lane-padded layout.
    # PyTorch nn.LSTM gate order is (i, f, g, o); repack to (i, f, o, g) so the
    # three sigmoid gates are lane-contiguous in the fused pre-activation.
    perm = jnp.array([0, 1, 3, 2])

    w_ih_g = w_ih.astype(f32).reshape(4, H)[perm]                   # (4, H) (input_size == 1)
    b_g = (b_ih + b_hh).astype(f32).reshape(4, H)[perm]             # (4, H)
    w_hh_t = w_hh.astype(f32).reshape(4, H, H)[perm].transpose(0, 2, 1)  # (4, H_in, H_out): h @ W

    # Pad each gate's output block to Hp lanes (zeros), then fuse on the lane axis.
    w_ih_pad = jnp.zeros((4, Hp), f32).at[:, :H].set(w_ih_g).reshape(4 * Hp)
    b_pad = jnp.zeros((4, Hp), f32).at[:, :H].set(b_g).reshape(4 * Hp)
    w_hh_fused = (
        jnp.zeros((4, Hp, Hp), f32).at[:, :H, :H].set(w_hh_t)
        .transpose(1, 0, 2)                                         # (Hp_in, 4, Hp_out)
        .reshape(Hp, 4 * Hp)
        .astype(bf16)                                               # bf16 MXU operand
    )
    fcw = jnp.zeros((Hp, O), f32).at[:H, :].set(fc_w.astype(f32).T)  # (Hp, O)
    fcb = fc_b.astype(f32).reshape(1, O)                            # (1, O)

    # Precompute input projection + bias for all timesteps in one XLA op:
    # (T, B, 4*Hp) bf16 (~3 MiB). input_size == 1 -> simple outer product.
    xw = (x.astype(f32).T[:, :, None] * w_ih_pad[None, None, :]
          + b_pad[None, None, :]).astype(bf16)

    out = pl.pallas_call(
        lstm_kernel,
        out_shape=jax.ShapeDtypeStruct((B, O), jnp.float32),
        in_specs=[pl.BlockSpec(memory_space=pltpu.MemorySpace.VMEM)] * 4,
        out_specs=pl.BlockSpec(memory_space=pltpu.MemorySpace.VMEM),
        compiler_params=pltpu.CompilerParams(vmem_limit_bytes=32 * 1024 * 1024),
    )(xw, w_hh_fused, fcw, fcb)
    return out


def lstm_net_ref(x, w_ih, w_hh, b_ih, b_hh, fc_w, fc_b):
    """Pure-JAX reference matching torch.nn.LSTM semantics (gate order i, f, g, o)."""
    B, T = x.shape
    H = w_hh.shape[1]

    def step(carry, x_t):
        h, c = carry
        gates = x_t[:, None] * w_ih[:, 0][None, :] + h @ w_hh.T + b_ih + b_hh
        i = jax.nn.sigmoid(gates[:, 0 * H:1 * H])
        f = jax.nn.sigmoid(gates[:, 1 * H:2 * H])
        g = jnp.tanh(gates[:, 2 * H:3 * H])
        o = jax.nn.sigmoid(gates[:, 3 * H:4 * H])
        c = f * c + i * g
        h = o * jnp.tanh(c)
        return (h, c), None

    init = (jnp.zeros((B, H), jnp.float32), jnp.zeros((B, H), jnp.float32))
    (h, _), _ = jax.lax.scan(step, init, x.T)
    return h @ fc_w.T + fc_b


if __name__ == "__main__":
    B, T, H, O = 4, SEQ, HIDDEN, OUT

    key = jax.random.PRNGKey(0)
    ks = jax.random.split(key, 7)
    k = 1.0 / jnp.sqrt(jnp.float32(H))  # PyTorch default uniform(-1/sqrt(H), 1/sqrt(H))
    w_ih = jax.random.uniform(ks[0], (4 * H, 1), jnp.float32, -k, k)
    w_hh = jax.random.uniform(ks[1], (4 * H, H), jnp.float32, -k, k)
    b_ih = jax.random.uniform(ks[2], (4 * H,), jnp.float32, -k, k)
    b_hh = jax.random.uniform(ks[3], (4 * H,), jnp.float32, -k, k)
    fc_w = jax.random.uniform(ks[4], (O, H), jnp.float32, -k, k)
    fc_b = jax.random.uniform(ks[5], (O,), jnp.float32, -k, k)
    x = jax.random.uniform(ks[6], (B, T), jnp.float32, 0.0, 10.0)  # synthetic LiDAR ranges

    out = lstm_net_forward(x, w_ih, w_hh, b_ih, b_hh, fc_w, fc_b)
    out = jax.block_until_ready(out)

    ref = lstm_net_ref(x, w_ih, w_hh, b_ih, b_hh, fc_w, fc_b)
    assert out.shape == (B, O)
    # bf16 matmul operands compound small rounding error over 360 recurrent steps;
    # state/accumulation stay f32, so the result remains well within this tolerance.
    assert jnp.allclose(out, ref, atol=3e-2, rtol=3e-2), (out, ref)

    print("KERNEL_OK")
</pallas_src>

<mosaic_0001>
module attributes {stable_mosaic.version = 11 : i64} {
  func.func @lstm_kernel(%arg0: memref<360x4x1024xbf16, #tpu.memory_space<vmem>>, %arg1: memref<256x1024xbf16, #tpu.memory_space<vmem>>, %arg2: memref<256x3xf32, #tpu.memory_space<vmem>>, %arg3: memref<1x3xf32, #tpu.memory_space<vmem>>, %arg4: memref<4x3xf32, #tpu.memory_space<vmem>>) attributes {dimension_semantics = [], scalar_prefetch = 0 : i64, scratch_operands = 0 : i64, tpu.core_type = #tpu.core_type<tc>} {
    %cst = arith.constant 0.000000e+00 : f32
    %0 = vector.broadcast %cst : f32 to vector<4x256xf32>
    %cst_0 = arith.constant 0.000000e+00 : f32
    %1 = vector.broadcast %cst_0 : f32 to vector<4x256xf32>
    %c0_i32 = arith.constant 0 : i32
    %c90_i32 = arith.constant 90 : i32
    %2 = arith.addi %c0_i32, %c90_i32 : i32
    %c1_i32 = arith.constant 1 : i32
    %3:2 = scf.for %arg5 = %c0_i32 to %2 step %c1_i32 iter_args(%arg6 = %0, %arg7 = %1) -> (vector<4x256xf32>, vector<4x256xf32>)  : i32 {
      %c4_i32 = arith.constant 4 : i32
      %10 = arith.muli %arg5, %c4_i32 : i32
      %c0_i32_8 = arith.constant 0 : i32
      %11 = arith.addi %10, %c0_i32_8 : i32
      %12 = arith.index_cast %11 : i32 to index
      %c0_9 = arith.constant 0 : index
      %c0_10 = arith.constant 0 : index
      %13 = vector.load %arg0[%12, %c0_9, %c0_10] : memref<360x4x1024xbf16, #tpu.memory_space<vmem>>, vector<1x4x1024xbf16>
      %14 = vector.shape_cast %13 : vector<1x4x1024xbf16> to vector<4x1024xbf16>
      %15 = arith.extf %14 : vector<4x1024xbf16> to vector<4x1024xf32>
      %16 = arith.truncf %arg6 : vector<4x256xf32> to vector<4x256xbf16>
      %c0_11 = arith.constant 0 : index
      %c0_12 = arith.constant 0 : index
      %17 = vector.load %arg1[%c0_11, %c0_12] : memref<256x1024xbf16, #tpu.memory_space<vmem>>, vector<256x1024xbf16>
      %cst_13 = arith.constant dense<0.000000e+00> : vector<4x1024xf32>
      %18 = tpu.matmul %16, %17, %cst_13 {dimension_numbers = #tpu.dot_dimension_numbers<[1], [0], [0], [1], [0, 0, 1, 1], [], []>} : vector<4x256xbf16>, vector<256x1024xbf16>, vector<4x1024xf32> -> vector<4x1024xf32>
      %19 = arith.addf %15, %18 : vector<4x1024xf32>
      %20 = vector.extract_strided_slice %19 {offsets = [0, 0], sizes = [4, 768], strides = [1, 1]} : vector<4x1024xf32> to vector<4x768xf32>
      %cst_14 = arith.constant 5.000000e-01 : f32
      %21 = vector.broadcast %cst_14 : f32 to vector<4x768xf32>
      %22 = arith.mulf %21, %20 : vector<4x768xf32>
      %23 = math.tanh %22 : vector<4x768xf32>
      %cst_15 = arith.constant 5.000000e-01 : f32
      %24 = vector.broadcast %cst_15 : f32 to vector<4x768xf32>
      %25 = arith.mulf %24, %23 : vector<4x768xf32>
      %cst_16 = arith.constant 5.000000e-01 : f32
      %26 = vector.broadcast %cst_16 : f32 to vector<4x768xf32>
      %27 = arith.addf %25, %26 : vector<4x768xf32>
      %28 = vector.extract_strided_slice %27 {offsets = [0, 0], sizes = [4, 256], strides = [1, 1]} : vector<4x768xf32> to vector<4x256xf32>
      %29 = vector.extract_strided_slice %27 {offsets = [0, 256], sizes = [4, 256], strides = [1, 1]} : vector<4x768xf32> to vector<4x256xf32>
      %30 = vector.extract_strided_slice %27 {offsets = [0, 512], sizes = [4, 256], strides = [1, 1]} : vector<4x768xf32> to vector<4x256xf32>
      %31 = vector.extract_strided_slice %19 {offsets = [0, 768], sizes = [4, 256], strides = [1, 1]} : vector<4x1024xf32> to vector<4x256xf32>
      %32 = math.tanh %31 : vector<4x256xf32>
      %33 = arith.mulf %29, %arg7 : vector<4x256xf32>
      %34 = arith.mulf %28, %32 : vector<4x256xf32>
      %35 = arith.addf %33, %34 : vector<4x256xf32>
      %36 = math.tanh %35 : vector<4x256xf32>
      %37 = arith.mulf %30, %36 : vector<4x256xf32>
      %c1_i32_17 = arith.constant 1 : i32
      %38 = arith.addi %10, %c1_i32_17 : i32
      %39 = arith.index_cast %38 : i32 to index
      %c0_18 = arith.constant 0 : index
      %c0_19 = arith.constant 0 : index
      %40 = vector.load %arg0[%39, %c0_18, %c0_19] : memref<360x4x1024xbf16, #tpu.memory_space<vmem>>, vector<1x4x1024xbf16>
      %41 = vector.shape_cast %40 : vector<1x4x1024xbf16> to vector<4x1024xbf16>
      %42 = arith.extf %41 : vector<4x1024xbf16> to vector<4x1024xf32>
      %43 = arith.truncf %37 : vector<4x256xf32> to vector<4x256xbf16>
      %c0_20 = arith.constant 0 : index
      %c0_21 = arith.constant 0 : index
      %44 = vector.load %arg1[%c0_20, %c0_21] : memref<256x1024xbf16, #tpu.memory_space<vmem>>, vector<256x1024xbf16>
      %cst_22 = arith.constant dense<0.000000e+00> : vector<4x1024xf32>
      %45 = tpu.matmul %43, %44, %cst_22 {dimension_numbers = #tpu.dot_dimension_numbers<[1], [0], [0], [1], [0, 0, 1, 1], [], []>} : vector<4x256xbf16>, vector<256x1024xbf16>, vector<4x1024xf32> -> vector<4x1024xf32>
      %46 = arith.addf %42, %45 : vector<4x1024xf32>
      %47 = vector.extract_strided_slice %46 {offsets = [0, 0], sizes = [4, 768], strides = [1, 1]} : vector<4x1024xf32> to vector<4x768xf32>
      %cst_23 = arith.constant 5.000000e-01 : f32
      %48 = vector.broadcast %cst_23 : f32 to vector<4x768xf32>
      %49 = arith.mulf %48, %47 : vector<4x768xf32>
      %50 = math.tanh %49 : vector<4x768xf32>
      %cst_24 = arith.constant 5.000000e-01 : f32
      %51 = vector.broadcast %cst_24 : f32 to vector<4x768xf32>
      %52 = arith.mulf %51, %50 : vector<4x768xf32>
      %cst_25 = arith.constant 5.000000e-01 : f32
      %53 = vector.broadcast %cst_25 : f32 to vector<4x768xf32>
      %54 = arith.addf %52, %53 : vector<4x768xf32>
      %55 = vector.extract_strided_slice %54 {offsets = [0, 0], sizes = [4, 256], strides = [1, 1]} : vector<4x768xf32> to vector<4x256xf32>
      %56 = vector.extract_strided_slice %54 {offsets = [0, 256], sizes = [4, 256], strides = [1, 1]} : vector<4x768xf32> to vector<4x256xf32>
      %57 = vector.extract_strided_slice %54 {offsets = [0, 512], sizes = [4, 256], strides = [1, 1]} : vector<4x768xf32> to vector<4x256xf32>
      %58 = vector.extract_strided_slice %46 {offsets = [0, 768], sizes = [4, 256], strides = [1, 1]} : vector<4x1024xf32> to vector<4x256xf32>
      %59 = math.tanh %58 : vector<4x256xf32>
      %60 = arith.mulf %56, %35 : vector<4x256xf32>
      %61 = arith.mulf %55, %59 : vector<4x256xf32>
      %62 = arith.addf %60, %61 : vector<4x256xf32>
      %63 = math.tanh %62 : vector<4x256xf32>
      %64 = arith.mulf %57, %63 : vector<4x256xf32>
      %c2_i32 = arith.constant 2 : i32
      %65 = arith.addi %10, %c2_i32 : i32
      %66 = arith.index_cast %65 : i32 to index
      %c0_26 = arith.constant 0 : index
      %c0_27 = arith.constant 0 : index
      %67 = vector.load %arg0[%66, %c0_26, %c0_27] : memref<360x4x1024xbf16, #tpu.memory_space<vmem>>, vector<1x4x1024xbf16>
      %68 = vector.shape_cast %67 : vector<1x4x1024xbf16> to vector<4x1024xbf16>
      %69 = arith.extf %68 : vector<4x1024xbf16> to vector<4x1024xf32>
      %70 = arith.truncf %64 : vector<4x256xf32> to vector<4x256xbf16>
      %c0_28 = arith.constant 0 : index
      %c0_29 = arith.constant 0 : index
      %71 = vector.load %arg1[%c0_28, %c0_29] : memref<256x1024xbf16, #tpu.memory_space<vmem>>, vector<256x1024xbf16>
      %cst_30 = arith.constant dense<0.000000e+00> : vector<4x1024xf32>
      %72 = tpu.matmul %70, %71, %cst_30 {dimension_numbers = #tpu.dot_dimension_numbers<[1], [0], [0], [1], [0, 0, 1, 1], [], []>} : vector<4x256xbf16>, vector<256x1024xbf16>, vector<4x1024xf32> -> vector<4x1024xf32>
      %73 = arith.addf %69, %72 : vector<4x1024xf32>
      %74 = vector.extract_strided_slice %73 {offsets = [0, 0], sizes = [4, 768], strides = [1, 1]} : vector<4x1024xf32> to vector<4x768xf32>
      %cst_31 = arith.constant 5.000000e-01 : f32
      %75 = vector.broadcast %cst_31 : f32 to vector<4x768xf32>
      %76 = arith.mulf %75, %74 : vector<4x768xf32>
      %77 = math.tanh %76 : vector<4x768xf32>
      %cst_32 = arith.constant 5.000000e-01 : f32
      %78 = vector.broadcast %cst_32 : f32 to vector<4x768xf32>
      %79 = arith.mulf %78, %77 : vector<4x768xf32>
      %cst_33 = arith.constant 5.000000e-01 : f32
      %80 = vector.broadcast %cst_33 : f32 to vector<4x768xf32>
      %81 = arith.addf %79, %80 : vector<4x768xf32>
      %82 = vector.extract_strided_slice %81 {offsets = [0, 0], sizes = [4, 256], strides = [1, 1]} : vector<4x768xf32> to vector<4x256xf32>
      %83 = vector.extract_strided_slice %81 {offsets = [0, 256], sizes = [4, 256], strides = [1, 1]} : vector<4x768xf32> to vector<4x256xf32>
      %84 = vector.extract_strided_slice %81 {offsets = [0, 512], sizes = [4, 256], strides = [1, 1]} : vector<4x768xf32> to vector<4x256xf32>
      %85 = vector.extract_strided_slice %73 {offsets = [0, 768], sizes = [4, 256], strides = [1, 1]} : vector<4x1024xf32> to vector<4x256xf32>
      %86 = math.tanh %85 : vector<4x256xf32>
      %87 = arith.mulf %83, %62 : vector<4x256xf32>
      %88 = arith.mulf %82, %86 : vector<4x256xf32>
      %89 = arith.addf %87, %88 : vector<4x256xf32>
      %90 = math.tanh %89 : vector<4x256xf32>
      %91 = arith.mulf %84, %90 : vector<4x256xf32>
      %c3_i32 = arith.constant 3 : i32
      %92 = arith.addi %10, %c3_i32 : i32
      %93 = arith.index_cast %92 : i32 to index
      %c0_34 = arith.constant 0 : index
      %c0_35 = arith.constant 0 : index
      %94 = vector.load %arg0[%93, %c0_34, %c0_35] : memref<360x4x1024xbf16, #tpu.memory_space<vmem>>, vector<1x4x1024xbf16>
      %95 = vector.shape_cast %94 : vector<1x4x1024xbf16> to vector<4x1024xbf16>
      %96 = arith.extf %95 : vector<4x1024xbf16> to vector<4x1024xf32>
      %97 = arith.truncf %91 : vector<4x256xf32> to vector<4x256xbf16>
      %c0_36 = arith.constant 0 : index
      %c0_37 = arith.constant 0 : index
      %98 = vector.load %arg1[%c0_36, %c0_37] : memref<256x1024xbf16, #tpu.memory_space<vmem>>, vector<256x1024xbf16>
      %cst_38 = arith.constant dense<0.000000e+00> : vector<4x1024xf32>
      %99 = tpu.matmul %97, %98, %cst_38 {dimension_numbers = #tpu.dot_dimension_numbers<[1], [0], [0], [1], [0, 0, 1, 1], [], []>} : vector<4x256xbf16>, vector<256x1024xbf16>, vector<4x1024xf32> -> vector<4x1024xf32>
      %100 = arith.addf %96, %99 : vector<4x1024xf32>
      %101 = vector.extract_strided_slice %100 {offsets = [0, 0], sizes = [4, 768], strides = [1, 1]} : vector<4x1024xf32> to vector<4x768xf32>
      %cst_39 = arith.constant 5.000000e-01 : f32
      %102 = vector.broadcast %cst_39 : f32 to vector<4x768xf32>
      %103 = arith.mulf %102, %101 : vector<4x768xf32>
      %104 = math.tanh %103 : vector<4x768xf32>
      %cst_40 = arith.constant 5.000000e-01 : f32
      %105 = vector.broadcast %cst_40 : f32 to vector<4x768xf32>
      %106 = arith.mulf %105, %104 : vector<4x768xf32>
      %cst_41 = arith.constant 5.000000e-01 : f32
      %107 = vector.broadcast %cst_41 : f32 to vector<4x768xf32>
      %108 = arith.addf %106, %107 : vector<4x768xf32>
      %109 = vector.extract_strided_slice %108 {offsets = [0, 0], sizes = [4, 256], strides = [1, 1]} : vector<4x768xf32> to vector<4x256xf32>
      %110 = vector.extract_strided_slice %108 {offsets = [0, 256], sizes = [4, 256], strides = [1, 1]} : vector<4x768xf32> to vector<4x256xf32>
      %111 = vector.extract_strided_slice %108 {offsets = [0, 512], sizes = [4, 256], strides = [1, 1]} : vector<4x768xf32> to vector<4x256xf32>
      %112 = vector.extract_strided_slice %100 {offsets = [0, 768], sizes = [4, 256], strides = [1, 1]} : vector<4x1024xf32> to vector<4x256xf32>
      %113 = math.tanh %112 : vector<4x256xf32>
      %114 = arith.mulf %110, %89 : vector<4x256xf32>
      %115 = arith.mulf %109, %113 : vector<4x256xf32>
      %116 = arith.addf %114, %115 : vector<4x256xf32>
      %117 = math.tanh %116 : vector<4x256xf32>
      %118 = arith.mulf %111, %117 : vector<4x256xf32>
      scf.yield %118, %116 : vector<4x256xf32>, vector<4x256xf32>
    }
    %c90_i32_1 = arith.constant 90 : i32
    %c0 = arith.constant 0 : index
    %c0_2 = arith.constant 0 : index
    %4 = vector.load %arg2[%c0, %c0_2] : memref<256x3xf32, #tpu.memory_space<vmem>>, vector<256x3xf32>
    %cst_3 = arith.constant dense<0.000000e+00> : vector<4x3xf32>
    %5 = tpu.matmul %3#0, %4, %cst_3 {dimension_numbers = #tpu.dot_dimension_numbers<[1], [0], [0], [1], [0, 0, 1, 1], [], []>} : vector<4x256xf32>, vector<256x3xf32>, vector<4x3xf32> -> vector<4x3xf32>
    %c0_4 = arith.constant 0 : index
    %c0_5 = arith.constant 0 : index
    %6 = vector.load %arg3[%c0_4, %c0_5] : memref<1x3xf32, #tpu.memory_space<vmem>>, vector<1x3xf32>
    %7 = vector.broadcast %6 : vector<1x3xf32> to vector<4x3xf32>
    %8 = arith.addf %5, %7 : vector<4x3xf32>
    %c0_6 = arith.constant 0 : index
    %c0_7 = arith.constant 0 : index
    %9 = vector.load %arg4[%c0_6, %c0_7] : memref<4x3xf32, #tpu.memory_space<vmem>>, vector<4x3xf32>
    tpu.vector_store %arg4[%c0_6, %c0_7], %8 {strides = array<i32>} : memref<4x3xf32, #tpu.memory_space<vmem>>, vector<4x3xf32>,
    return
  }
}

</mosaic_0001>

<llo_original>
// kernel: tpu_custom_call.1
$region0: #{tpu_custom_call.1}
  #allocation0 [shape = 'u32[]', space=smem, size = 0x4, offset = 0x4, fixed_abs, tag = 'smem constant byte address 0x4 - core index']
  #allocation1 [shape = 'u32[144,128]{1,0:T(1,128)}', space=vmem, size = 0x12000, scoped, tag = 'internal scratch']
  %s0 = inlined_call_operand.hbm [shape: bf16[360,4,1024], index: 0, kind: input, shape index: {}]
  %s1 = inlined_call_operand.hbm [shape: bf16[256,1024], index: 1, kind: input, shape index: {}]
  %s2 = inlined_call_operand.vmem [shape: f32[256,3], index: 2, kind: input, shape index: {}]
  %s3 = inlined_call_operand.hbm [shape: f32[1,3], index: 3, kind: input, shape index: {}]
  %s4 = inlined_call_operand.hbm [shape: f32[4,3], index: 4, kind: output, shape index: {}]
  %s5 = sld [smem:[#allocation0]]
  $region45: #{tpu_custom_call.1} parent=0
    _
  %s7 = ssub.s32 1, %s5
  %s8 = scalar_select 0, %s7, %s5
  $region1: #{tpu_custom_call.1} parent=0
    #allocation2 [shape = 'u8[2949120]{0}', space=vmem, size = 0x2d0000, scoped, tag = 'input window, operand 0, single buffered']
    #allocation3 [shape = 's32[1]{0}', space=sflag, size = 0x4, scoped, tag = 'scoped memory for tpu_custom_call.1']
    #allocation4 [shape = 's32[1]{0}', space=sflag, size = 0x4, scoped, tag = 'scoped memory for tpu_custom_call.1']
    #allocation5 [shape = 'u8[524288]{0}', space=vmem, size = 0x80000, scoped, tag = 'input window, operand 1, single buffered']
    #allocation6 [shape = 's32[1]{0}', space=sflag, size = 0x4, scoped, tag = 'scoped memory for tpu_custom_call.1']
    #allocation7 [shape = 'u8[512]{0}', space=vmem, size = 0x400, scoped, tag = 'input window, operand 3, single buffered']
    #allocation8 [shape = 'u8[2048]{0}', space=vmem, size = 0x800, scoped, tag = 'output window, operand 0, single buffered']
    %9 = vsyncpa [#allocation3], 0
    %10 = vsyncpa [#allocation6], 0
    %11 = vsyncpa [#allocation4], 0
    // Predicated region
    $region2: #{tpu_custom_call.1} parent=1 // pred_check
      _
    $region3: #{tpu_custom_call.1} parent=1 // pred_check_branch
      %13 = sbr.rel (0) target = $region5
    $region4: #{tpu_custom_call.1} parent=1 // pred_region
      %s15 = ssub.s32 92160, 92160
      %16 = vsyncadd [#allocation3], %s15
      %s17 = sshll.u32 [#allocation2], 4
      %s18 = int_to_ptr.vmem [resolvable:$true] %s17
      %23 = dma.hbm_to_vmem [thread:$0]  %s0, 92160, %s18, [#allocation3], 256, 256, 16
    $region5: #{tpu_custom_call.1} parent=1 // pred_fallthru
      _
    // Predicated region
    $region6: #{tpu_custom_call.1} parent=1 // pred_check
      _
    $region7: #{tpu_custom_call.1} parent=1 // pred_check_branch
      %25 = sbr.rel (0) target = $region9
    $region8: #{tpu_custom_call.1} parent=1 // pred_region
      %s27 = ssub.s32 16384, 16384
      %28 = vsyncadd [#allocation6], %s27
      %s29 = sshll.u32 [#allocation5], 4
      %s30 = int_to_ptr.vmem [resolvable:$true] %s29
      %35 = dma.hbm_to_vmem [thread:$0]  %s1, 16384, %s30, [#allocation6], 512, 512, 32
    $region9: #{tpu_custom_call.1} parent=1 // pred_fallthru
      _
    // Predicated region
    $region10: #{tpu_custom_call.1} parent=1 // pred_check
      _
    $region11: #{tpu_custom_call.1} parent=1 // pred_check_branch
      %37 = sbr.rel (0) target = $region13
    $region12: #{tpu_custom_call.1} parent=1 // pred_region
      _
    $region13: #{tpu_custom_call.1} parent=1 // pred_fallthru
      _
    // Predicated region
    $region14: #{tpu_custom_call.1} parent=1 // pred_check
      _
    $region15: #{tpu_custom_call.1} parent=1 // pred_check_branch
      %39 = sbr.rel (0) target = $region17
    $region16: #{tpu_custom_call.1} parent=1 // pred_region
      %s41 = ssub.s32 16, 16
      %42 = vsyncadd [#allocation6], %s41
      %s44 = sshll.u32 [#allocation7], 4
      %s45 = int_to_ptr.vmem [resolvable:$true] %s44
      %47 = dma.hbm_to_vmem [thread:$0]  %s3, 16, %s45, [#allocation6]
    $region17: #{tpu_custom_call.1} parent=1 // pred_fallthru
      _
    // Predicated region
    $region18: #{tpu_custom_call.1} parent=1 // pred_check
      _
    $region19: #{tpu_custom_call.1} parent=1 // pred_check_branch
      %49 = sbr.rel (0) target = $region21
    $region20: #{tpu_custom_call.1} parent=1 // pred_region
      %50 = dma.done [#allocation3], 92160
    $region21: #{tpu_custom_call.1} parent=1 // pred_fallthru
      _
    // Predicated region
    $region22: #{tpu_custom_call.1} parent=1 // pred_check
      _
    $region23: #{tpu_custom_call.1} parent=1 // pred_check_branch
      %52 = sbr.rel (0) target = $region25
    $region24: #{tpu_custom_call.1} parent=1 // pred_region
      %53 = dma.done [#allocation6], 16384
    $region25: #{tpu_custom_call.1} parent=1 // pred_fallthru
      _
    // Predicated region
    $region26: #{tpu_custom_call.1} parent=1 // pred_check
      _
    $region27: #{tpu_custom_call.1} parent=1 // pred_check_branch
      %55 = sbr.rel (0) target = $region29
    $region28: #{tpu_custom_call.1} parent=1 // pred_region
      %56 = dma.done [#allocation6], 16
    $region29: #{tpu_custom_call.1} parent=1 // pred_fallthru
      _
    loop: start=0, step=1, limit=90
    $region30: #{tpu_custom_call.1} parent=1 // loop_pre_header
      _
    $region31: #{tpu_custom_call.1} parent=1 // loop_header
      %s58 = sphi 0, %s62
      %p59 = scmp.ge.s32.totalorder %s58, 90
      %v63 = vphi 0.0, %v1700
      %v64 = vphi 0.0, %v1698
    $region32: #{tpu_custom_call.1} parent=1 // loop_header_branch
      %61 = sbr.rel (%p59) target = $region36
    $region33: #{tpu_custom_call.1} parent=1 // loop_body
      %s65 = smul.u32 %s58, 4
      %s66 = smul.u32 %s65, 8
      %s67 = smul.addr %s66, 2
      %s68 = scalar_lea.vmem [#allocation2], %s67
      %v69 = vld [vmem:[%s68] sm:$0xff]
      %v70 = vld [vmem:[%s68 + $0x8] sm:$0xff]
      %v71 = vunpack.c.l.bf16 %v69
      %v72 = vunpack.c.h.bf16 %v69
      %v73 = vunpack.c.l.bf16 %v70
      %v74 = vunpack.c.h.bf16 %v70
      %v76 = vcombine.high %v63, %v63
      %v78 = vpack.c.bf16 %v63, %v63
      %v79 = vpack.c.bf16 %v76, %v76
      %v80 = vld [vmem:[#allocation5] sm:$0xff]
      %v81 = vld [vmem:[#allocation5 + $0x8] sm:$0xff]
      %v82 = vld [vmem:[#allocation5 + $0x10] sm:$0xff]
      %v83 = vld [vmem:[#allocation5 + $0x18] sm:$0xff]
      %v84 = vld [vmem:[#allocation5 + $0x20] sm:$0xff]
      %v85 = vld [vmem:[#allocation5 + $0x28] sm:$0xff]
      %v86 = vld [vmem:[#allocation5 + $0x30] sm:$0xff]
      %v87 = vld [vmem:[#allocation5 + $0x38] sm:$0xff]
      %v88 = vld [vmem:[#allocation5 + $0x40] sm:$0xff]
      %v89 = vld [vmem:[#allocation5 + $0x48] sm:$0xff]
      %v90 = vld [vmem:[#allocation5 + $0x50] sm:$0xff]
      %v91 = vld [vmem:[#allocation5 + $0x58] sm:$0xff]
      %v92 = vld [vmem:[#allocation5 + $0x60] sm:$0xff]
      %v93 = vld [vmem:[#allocation5 + $0x68] sm:$0xff]
      %v94 = vld [vmem:[#allocation5 + $0x70] sm:$0xff]
      %v95 = vld [vmem:[#allocation5 + $0x78] sm:$0xff]
      %v96 = vld [vmem:[#allocation5 + $0x80] sm:$0xff]
      %v97 = vld [vmem:[#allocation5 + $0x88] sm:$0xff]
      %v98 = vld [vmem:[#allocation5 + $0x90] sm:$0xff]
      %v99 = vld [vmem:[#allocation5 + $0x98] sm:$0xff]
      %v100 = vld [vmem:[#allocation5 + $0xa0] sm:$0xff]
      %v101 = vld [vmem:[#allocation5 + $0xa8] sm:$0xff]
      %v102 = vld [vmem:[#allocation5 + $0xb0] sm:$0xff]
      %v103 = vld [vmem:[#allocation5 + $0xb8] sm:$0xff]
      %v104 = vld [vmem:[#allocation5 + $0xc0] sm:$0xff]
      %v105 = vld [vmem:[#allocation5 + $0xc8] sm:$0xff]
      %v106 = vld [vmem:[#allocation5 + $0xd0] sm:$0xff]
      %v107 = vld [vmem:[#allocation5 + $0xd8] sm:$0xff]
      %v108 = vld [vmem:[#allocation5 + $0xe0] sm:$0xff]
      %v109 = vld [vmem:[#allocation5 + $0xe8] sm:$0xff]
      %v110 = vld [vmem:[#allocation5 + $0xf0] sm:$0xff]
      %v111 = vld [vmem:[#allocation5 + $0xf8] sm:$0xff]
      %v112 = vld [vmem:[#allocation5 + $0x100] sm:$0xff]
      %v113 = vld [vmem:[#allocation5 + $0x108] sm:$0xff]
      %v114 = vld [vmem:[#allocation5 + $0x110] sm:$0xff]
      %v115 = vld [vmem:[#allocation5 + $0x118] sm:$0xff]
      %v116 = vld [vmem:[#allocation5 + $0x120] sm:$0xff]
      %v117 = vld [vmem:[#allocation5 + $0x128] sm:$0xff]
      %v118 = vld [vmem:[#allocation5 + $0x130] sm:$0xff]
      %v119 = vld [vmem:[#allocation5 + $0x138] sm:$0xff]
      %v120 = vld [vmem:[#allocation5 + $0x140] sm:$0xff]
      %v121 = vld [vmem:[#allocation5 + $0x148] sm:$0xff]
      %v122 = vld [vmem:[#allocation5 + $0x150] sm:$0xff]
      %v123 = vld [vmem:[#allocation5 + $0x158] sm:$0xff]
      %v124 = vld [vmem:[#allocation5 + $0x160] sm:$0xff]
      %v125 = vld [vmem:[#allocation5 + $0x168] sm:$0xff]
      %v126 = vld [vmem:[#allocation5 + $0x170] sm:$0xff]
      %v127 = vld [vmem:[#allocation5 + $0x178] sm:$0xff]
      %v128 = vld [vmem:[#allocation5 + $0x180] sm:$0xff]
      %v129 = vld [vmem:[#allocation5 + $0x188] sm:$0xff]
      %v130 = vld [vmem:[#allocation5 + $0x190] sm:$0xff]
      %v131 = vld [vmem:[#allocation5 + $0x198] sm:$0xff]
      %v132 = vld [vmem:[#allocation5 + $0x1a0] sm:$0xff]
      %v133 = vld [vmem:[#allocation5 + $0x1a8] sm:$0xff]
      %v134 = vld [vmem:[#allocation5 + $0x1b0] sm:$0xff]
      %v135 = vld [vmem:[#allocation5 + $0x1b8] sm:$0xff]
      %v136 = vld [vmem:[#allocation5 + $0x1c0] sm:$0xff]
      %v137 = vld [vmem:[#allocation5 + $0x1c8] sm:$0xff]
      %v138 = vld [vmem:[#allocation5 + $0x1d0] sm:$0xff]
      %v139 = vld [vmem:[#allocation5 + $0x1d8] sm:$0xff]
      %v140 = vld [vmem:[#allocation5 + $0x1e0] sm:$0xff]
      %v141 = vld [vmem:[#allocation5 + $0x1e8] sm:$0xff]
      %v142 = vld [vmem:[#allocation5 + $0x1f0] sm:$0xff]
      %v143 = vld [vmem:[#allocation5 + $0x1f8] sm:$0xff]
      %v144 = vld [vmem:[#allocation5 + $0x200] sm:$0xff]
      %v145 = vld [vmem:[#allocation5 + $0x208] sm:$0xff]
      %v146 = vld [vmem:[#allocation5 + $0x210] sm:$0xff]
      %v147 = vld [vmem:[#allocation5 + $0x218] sm:$0xff]
      %v148 = vld [vmem:[#allocation5 + $0x220] sm:$0xff]
      %v149 = vld [vmem:[#allocation5 + $0x228] sm:$0xff]
      %v150 = vld [vmem:[#allocation5 + $0x230] sm:$0xff]
      %v151 = vld [vmem:[#allocation5 + $0x238] sm:$0xff]
      %v152 = vld [vmem:[#allocation5 + $0x240] sm:$0xff]
      %v153 = vld [vmem:[#allocation5 + $0x248] sm:$0xff]
      %v154 = vld [vmem:[#allocation5 + $0x250] sm:$0xff]
      %v155 = vld [vmem:[#allocation5 + $0x258] sm:$0xff]
      %v156 = vld [vmem:[#allocation5 + $0x260] sm:$0xff]
      %v157 = vld [vmem:[#allocation5 + $0x268] sm:$0xff]
      %v158 = vld [vmem:[#allocation5 + $0x270] sm:$0xff]
      %v159 = vld [vmem:[#allocation5 + $0x278] sm:$0xff]
      %v160 = vld [vmem:[#allocation5 + $0x280] sm:$0xff]
      %v161 = vld [vmem:[#allocation5 + $0x288] sm:$0xff]
      %v162 = vld [vmem:[#allocation5 + $0x290] sm:$0xff]
      %v163 = vld [vmem:[#allocation5 + $0x298] sm:$0xff]
      %v164 = vld [vmem:[#allocation5 + $0x2a0] sm:$0xff]
      %v165 = vld [vmem:[#allocation5 + $0x2a8] sm:$0xff]
      %v166 = vld [vmem:[#allocation5 + $0x2b0] sm:$0xff]
      %v167 = vld [vmem:[#allocation5 + $0x2b8] sm:$0xff]
      %v168 = vld [vmem:[#allocation5 + $0x2c0] sm:$0xff]
      %v169 = vld [vmem:[#allocation5 + $0x2c8] sm:$0xff]
      %v170 = vld [vmem:[#allocation5 + $0x2d0] sm:$0xff]
      %v171 = vld [vmem:[#allocation5 + $0x2d8] sm:$0xff]
      %v172 = vld [vmem:[#allocation5 + $0x2e0] sm:$0xff]
      %v173 = vld [vmem:[#allocation5 + $0x2e8] sm:$0xff]
      %v174 = vld [vmem:[#allocation5 + $0x2f0] sm:$0xff]
      %v175 = vld [vmem:[#allocation5 + $0x2f8] sm:$0xff]
      %v176 = vld [vmem:[#allocation5 + $0x300] sm:$0xff]
      %v177 = vld [vmem:[#allocation5 + $0x308] sm:$0xff]
      %v178 = vld [vmem:[#allocation5 + $0x310] sm:$0xff]
      %v179 = vld [vmem:[#allocation5 + $0x318] sm:$0xff]
      %v180 = vld [vmem:[#allocation5 + $0x320] sm:$0xff]
      %v181 = vld [vmem:[#allocation5 + $0x328] sm:$0xff]
      %v182 = vld [vmem:[#allocation5 + $0x330] sm:$0xff]
      %v183 = vld [vmem:[#allocation5 + $0x338] sm:$0xff]
      %v184 = vld [vmem:[#allocation5 + $0x340] sm:$0xff]
      %v185 = vld [vmem:[#allocation5 + $0x348] sm:$0xff]
      %v186 = vld [vmem:[#allocation5 + $0x350] sm:$0xff]
      %v187 = vld [vmem:[#allocation5 + $0x358] sm:$0xff]
      %v188 = vld [vmem:[#allocation5 + $0x360] sm:$0xff]
      %v189 = vld [vmem:[#allocation5 + $0x368] sm:$0xff]
      %v190 = vld [vmem:[#allocation5 + $0x370] sm:$0xff]
      %v191 = vld [vmem:[#allocation5 + $0x378] sm:$0xff]
      %v192 = vld [vmem:[#allocation5 + $0x380] sm:$0xff]
      %v193 = vld [vmem:[#allocation5 + $0x388] sm:$0xff]
      %v194 = vld [vmem:[#allocation5 + $0x390] sm:$0xff]
      %v195 = vld [vmem:[#allocation5 + $0x398] sm:$0xff]
      %v196 = vld [vmem:[#allocation5 + $0x3a0] sm:$0xff]
      %v197 = vld [vmem:[#allocation5 + $0x3a8] sm:$0xff]
      %v198 = vld [vmem:[#allocation5 + $0x3b0] sm:$0xff]
      %v199 = vld [vmem:[#allocation5 + $0x3b8] sm:$0xff]
      %v200 = vld [vmem:[#allocation5 + $0x3c0] sm:$0xff]
      %v201 = vld [vmem:[#allocation5 + $0x3c8] sm:$0xff]
      %v202 = vld [vmem:[#allocation5 + $0x3d0] sm:$0xff]
      %v203 = vld [vmem:[#allocation5 + $0x3d8] sm:$0xff]
      %v204 = vld [vmem:[#allocation5 + $0x3e0] sm:$0xff]
      %v205 = vld [vmem:[#allocation5 + $0x3e8] sm:$0xff]
      %v206 = vld [vmem:[#allocation5 + $0x3f0] sm:$0xff]
      %v207 = vld [vmem:[#allocation5 + $0x3f8] sm:$0xff]
      %v336 = vunpack.c.l.b16 %v80
      %v337 = vunpack.c.h.b16 %v80
      %v338 = vunpack.c.l.b16 %v81
      %v339 = vunpack.c.h.b16 %v81
      %v340 = vunpack.c.l.b16 %v82
      %v341 = vunpack.c.h.b16 %v82
      %v342 = vunpack.c.l.b16 %v83
      %v343 = vunpack.c.h.b16 %v83
      %v344 = vunpack.c.l.b16 %v84
      %v345 = vunpack.c.h.b16 %v84
      %v346 = vunpack.c.l.b16 %v85
      %v347 = vunpack.c.h.b16 %v85
      %v348 = vunpack.c.l.b16 %v86
      %v349 = vunpack.c.h.b16 %v86
      %v350 = vunpack.c.l.b16 %v87
      %v351 = vunpack.c.h.b16 %v87
      %v352 = vunpack.c.l.b16 %v88
      %v353 = vunpack.c.h.b16 %v88
      %v354 = vunpack.c.l.b16 %v89
      %v355 = vunpack.c.h.b16 %v89
      %v356 = vunpack.c.l.b16 %v90
      %v357 = vunpack.c.h.b16 %v90
      %v358 = vunpack.c.l.b16 %v91
      %v359 = vunpack.c.h.b16 %v91
      %v360 = vunpack.c.l.b16 %v92
      %v361 = vunpack.c.h.b16 %v92
      %v362 = vunpack.c.l.b16 %v93
      %v363 = vunpack.c.h.b16 %v93
      %v364 = vunpack.c.l.b16 %v94
      %v365 = vunpack.c.h.b16 %v94
      %v366 = vunpack.c.l.b16 %v95
      %v367 = vunpack.c.h.b16 %v95
      %v368 = vunpack.c.l.b16 %v96
      %v369 = vunpack.c.h.b16 %v96
      %v370 = vunpack.c.l.b16 %v97
      %v371 = vunpack.c.h.b16 %v97
      %v372 = vunpack.c.l.b16 %v98
      %v373 = vunpack.c.h.b16 %v98
      %v374 = vunpack.c.l.b16 %v99
      %v375 = vunpack.c.h.b16 %v99
      %v376 = vunpack.c.l.b16 %v100
      %v377 = vunpack.c.h.b16 %v100
      %v378 = vunpack.c.l.b16 %v101
      %v379 = vunpack.c.h.b16 %v101
      %v380 = vunpack.c.l.b16 %v102
      %v381 = vunpack.c.h.b16 %v102
      %v382 = vunpack.c.l.b16 %v103
      %v383 = vunpack.c.h.b16 %v103
      %v384 = vunpack.c.l.b16 %v104
      %v385 = vunpack.c.h.b16 %v104
      %v386 = vunpack.c.l.b16 %v105
      %v387 = vunpack.c.h.b16 %v105
      %v388 = vunpack.c.l.b16 %v106
      %v389 = vunpack.c.h.b16 %v106
      %v390 = vunpack.c.l.b16 %v107
      %v391 = vunpack.c.h.b16 %v107
      %v392 = vunpack.c.l.b16 %v108
      %v393 = vunpack.c.h.b16 %v108
      %v394 = vunpack.c.l.b16 %v109
      %v395 = vunpack.c.h.b16 %v109
      %v396 = vunpack.c.l.b16 %v110
      %v397 = vunpack.c.h.b16 %v110
      %v398 = vunpack.c.l.b16 %v111
      %v399 = vunpack.c.h.b16 %v111
      %v400 = vunpack.c.l.b16 %v112
      %v401 = vunpack.c.h.b16 %v112
      %v402 = vunpack.c.l.b16 %v113
      %v403 = vunpack.c.h.b16 %v113
      %v404 = vunpack.c.l.b16 %v114
      %v405 = vunpack.c.h.b16 %v114
      %v406 = vunpack.c.l.b16 %v115
      %v407 = vunpack.c.h.b16 %v115
      %v408 = vunpack.c.l.b16 %v116
      %v409 = vunpack.c.h.b16 %v116
      %v410 = vunpack.c.l.b16 %v117
      %v411 = vunpack.c.h.b16 %v117
      %v412 = vunpack.c.l.b16 %v118
      %v413 = vunpack.c.h.b16 %v118
      %v414 = vunpack.c.l.b16 %v119
      %v415 = vunpack.c.h.b16 %v119
      %v416 = vunpack.c.l.b16 %v120
      %v417 = vunpack.c.h.b16 %v120
      %v418 = vunpack.c.l.b16 %v121
      %v419 = vunpack.c.h.b16 %v121
      %v420 = vunpack.c.l.b16 %v122
      %v421 = vunpack.c.h.b16 %v122
      %v422 = vunpack.c.l.b16 %v123
      %v423 = vunpack.c.h.b16 %v123
      %v424 = vunpack.c.l.b16 %v124
      %v425 = vunpack.c.h.b16 %v124
      %v426 = vunpack.c.l.b16 %v125
      %v427 = vunpack.c.h.b16 %v125
      %v428 = vunpack.c.l.b16 %v126
      %v429 = vunpack.c.h.b16 %v126
      %v430 = vunpack.c.l.b16 %v127
      %v431 = vunpack.c.h.b16 %v127
      %v432 = vunpack.c.l.b16 %v128
      %v433 = vunpack.c.h.b16 %v128
      %v434 = vunpack.c.l.b16 %v129
      %v435 = vunpack.c.h.b16 %v129
      %v436 = vunpack.c.l.b16 %v130
      %v437 = vunpack.c.h.b16 %v130
      %v438 = vunpack.c.l.b16 %v131
      %v439 = vunpack.c.h.b16 %v131
      %v440 = vunpack.c.l.b16 %v132
      %v441 = vunpack.c.h.b16 %v132
      %v442 = vunpack.c.l.b16 %v133
      %v443 = vunpack.c.h.b16 %v133
      %v444 = vunpack.c.l.b16 %v134
      %v445 = vunpack.c.h.b16 %v134
      %v446 = vunpack.c.l.b16 %v135
      %v447 = vunpack.c.h.b16 %v135
      %v448 = vunpack.c.l.b16 %v136
      %v449 = vunpack.c.h.b16 %v136
      %v450 = vunpack.c.l.b16 %v137
      %v451 = vunpack.c.h.b16 %v137
      %v452 = vunpack.c.l.b16 %v138
      %v453 = vunpack.c.h.b16 %v138
      %v454 = vunpack.c.l.b16 %v139
      %v455 = vunpack.c.h.b16 %v139
      %v456 = vunpack.c.l.b16 %v140
      %v457 = vunpack.c.h.b16 %v140
      %v458 = vunpack.c.l.b16 %v141
      %v459 = vunpack.c.h.b16 %v141
      %v460 = vunpack.c.l.b16 %v142
      %v461 = vunpack.c.h.b16 %v142
      %v462 = vunpack.c.l.b16 %v143
      %v463 = vunpack.c.h.b16 %v143
      %v464 = vunpack.c.l.b16 %v144
      %v465 = vunpack.c.h.b16 %v144
      %v466 = vunpack.c.l.b16 %v145
      %v467 = vunpack.c.h.b16 %v145
      %v468 = vunpack.c.l.b16 %v146
      %v469 = vunpack.c.h.b16 %v146
      %v470 = vunpack.c.l.b16 %v147
      %v471 = vunpack.c.h.b16 %v147
      %v472 = vunpack.c.l.b16 %v148
      %v473 = vunpack.c.h.b16 %v148
      %v474 = vunpack.c.l.b16 %v149
      %v475 = vunpack.c.h.b16 %v149
      %v476 = vunpack.c.l.b16 %v150
      %v477 = vunpack.c.h.b16 %v150
      %v478 = vunpack.c.l.b16 %v151
      %v479 = vunpack.c.h.b16 %v151
      %v480 = vunpack.c.l.b16 %v152
      %v481 = vunpack.c.h.b16 %v152
      %v482 = vunpack.c.l.b16 %v153
      %v483 = vunpack.c.h.b16 %v153
      %v484 = vunpack.c.l.b16 %v154
      %v485 = vunpack.c.h.b16 %v154
      %v486 = vunpack.c.l.b16 %v155
      %v487 = vunpack.c.h.b16 %v155
      %v488 = vunpack.c.l.b16 %v156
      %v489 = vunpack.c.h.b16 %v156
      %v490 = vunpack.c.l.b16 %v157
      %v491 = vunpack.c.h.b16 %v157
      %v492 = vunpack.c.l.b16 %v158
      %v493 = vunpack.c.h.b16 %v158
      %v494 = vunpack.c.l.b16 %v159
      %v495 = vunpack.c.h.b16 %v159
      %v496 = vunpack.c.l.b16 %v160
      %v497 = vunpack.c.h.b16 %v160
      %v498 = vunpack.c.l.b16 %v161
      %v499 = vunpack.c.h.b16 %v161
      %v500 = vunpack.c.l.b16 %v162
      %v501 = vunpack.c.h.b16 %v162
      %v502 = vunpack.c.l.b16 %v163
      %v503 = vunpack.c.h.b16 %v163
      %v504 = vunpack.c.l.b16 %v164
      %v505 = vunpack.c.h.b16 %v164
      %v506 = vunpack.c.l.b16 %v165
      %v507 = vunpack.c.h.b16 %v165
      %v508 = vunpack.c.l.b16 %v166
      %v509 = vunpack.c.h.b16 %v166
      %v510 = vunpack.c.l.b16 %v167
      %v511 = vunpack.c.h.b16 %v167
      %v512 = vunpack.c.l.b16 %v168
      %v513 = vunpack.c.h.b16 %v168
      %v514 = vunpack.c.l.b16 %v169
      %v515 = vunpack.c.h.b16 %v169
      %v516 = vunpack.c.l.b16 %v170
      %v517 = vunpack.c.h.b16 %v170
      %v518 = vunpack.c.l.b16 %v171
      %v519 = vunpack.c.h.b16 %v171
      %v520 = vunpack.c.l.b16 %v172
      %v521 = vunpack.c.h.b16 %v172
      %v522 = vunpack.c.l.b16 %v173
      %v523 = vunpack.c.h.b16 %v173
      %v524 = vunpack.c.l.b16 %v174
      %v525 = vunpack.c.h.b16 %v174
      %v526 = vunpack.c.l.b16 %v175
      %v527 = vunpack.c.h.b16 %v175
      %v528 = vunpack.c.l.b16 %v176
      %v529 = vunpack.c.h.b16 %v176
      %v530 = vunpack.c.l.b16 %v177
      %v531 = vunpack.c.h.b16 %v177
      %v532 = vunpack.c.l.b16 %v178
      %v533 = vunpack.c.h.b16 %v178
      %v534 = vunpack.c.l.b16 %v179
      %v535 = vunpack.c.h.b16 %v179
      %v536 = vunpack.c.l.b16 %v180
      %v537 = vunpack.c.h.b16 %v180
      %v538 = vunpack.c.l.b16 %v181
      %v539 = vunpack.c.h.b16 %v181
      %v540 = vunpack.c.l.b16 %v182
      %v541 = vunpack.c.h.b16 %v182
      %v542 = vunpack.c.l.b16 %v183
      %v543 = vunpack.c.h.b16 %v183
      %v544 = vunpack.c.l.b16 %v184
      %v545 = vunpack.c.h.b16 %v184
      %v546 = vunpack.c.l.b16 %v185
      %v547 = vunpack.c.h.b16 %v185
      %v548 = vunpack.c.l.b16 %v186
      %v549 = vunpack.c.h.b16 %v186
      %v550 = vunpack.c.l.b16 %v187
      %v551 = vunpack.c.h.b16 %v187
      %v552 = vunpack.c.l.b16 %v188
      %v553 = vunpack.c.h.b16 %v188
      %v554 = vunpack.c.l.b16 %v189
      %v555 = vunpack.c.h.b16 %v189
      %v556 = vunpack.c.l.b16 %v190
      %v557 = vunpack.c.h.b16 %v190
      %v558 = vunpack.c.l.b16 %v191
      %v559 = vunpack.c.h.b16 %v191
      %v560 = vunpack.c.l.b16 %v192
      %v561 = vunpack.c.h.b16 %v192
      %v562 = vunpack.c.l.b16 %v193
      %v563 = vunpack.c.h.b16 %v193
      %v564 = vunpack.c.l.b16 %v194
      %v565 = vunpack.c.h.b16 %v194
      %v566 = vunpack.c.l.b16 %v195
      %v567 = vunpack.c.h.b16 %v195
      %v568 = vunpack.c.l.b16 %v196
      %v569 = vunpack.c.h.b16 %v196
      %v570 = vunpack.c.l.b16 %v197
      %v571 = vunpack.c.h.b16 %v197
      %v572 = vunpack.c.l.b16 %v198
      %v573 = vunpack.c.h.b16 %v198
      %v574 = vunpack.c.l.b16 %v199
      %v575 = vunpack.c.h.b16 %v199
      %v576 = vunpack.c.l.b16 %v200
      %v577 = vunpack.c.h.b16 %v200
      %v578 = vunpack.c.l.b16 %v201
      %v579 = vunpack.c.h.b16 %v201
      %v580 = vunpack.c.l.b16 %v202
      %v581 = vunpack.c.h.b16 %v202
      %v582 = vunpack.c.l.b16 %v203
      %v583 = vunpack.c.h.b16 %v203
      %v584 = vunpack.c.l.b16 %v204
      %v585 = vunpack.c.h.b16 %v204
      %v586 = vunpack.c.l.b16 %v205
      %v587 = vunpack.c.h.b16 %v205
      %v588 = vunpack.c.l.b16 %v206
      %v589 = vunpack.c.h.b16 %v206
      %v590 = vunpack.c.l.b16 %v207
      %v591 = vunpack.c.h.b16 %v207
      %v592 = vpack.c.b16 %v344, %v336
      %v593 = vpack.c.b16 %v345, %v337
      %v594 = vpack.c.b16 %v346, %v338
      %v595 = vpack.c.b16 %v347, %v339
      %v596 = vpack.c.b16 %v348, %v340
      %v597 = vpack.c.b16 %v349, %v341
      %v598 = vpack.c.b16 %v350, %v342
      %v599 = vpack.c.b16 %v351, %v343
      %v600 = vpack.c.b16 %v360, %v352
      %v601 = vpack.c.b16 %v361, %v353
      %v602 = vpack.c.b16 %v362, %v354
      %v603 = vpack.c.b16 %v363, %v355
      %v604 = vpack.c.b16 %v364, %v356
      %v605 = vpack.c.b16 %v365, %v357
      %v606 = vpack.c.b16 %v366, %v358
      %v607 = vpack.c.b16 %v367, %v359
      %v608 = vpack.c.b16 %v376, %v368
      %v609 = vpack.c.b16 %v377, %v369
      %v610 = vpack.c.b16 %v378, %v370
      %v611 = vpack.c.b16 %v379, %v371
      %v612 = vpack.c.b16 %v380, %v372
      %v613 = vpack.c.b16 %v381, %v373
      %v614 = vpack.c.b16 %v382, %v374
      %v615 = vpack.c.b16 %v383, %v375
      %v616 = vpack.c.b16 %v392, %v384
      %v617 = vpack.c.b16 %v393, %v385
      %v618 = vpack.c.b16 %v394, %v386
      %v619 = vpack.c.b16 %v395, %v387
      %v620 = vpack.c.b16 %v396, %v388
      %v621 = vpack.c.b16 %v397, %v389
      %v622 = vpack.c.b16 %v398, %v390
      %v623 = vpack.c.b16 %v399, %v391
      %v624 = vpack.c.b16 %v408, %v400
      %v625 = vpack.c.b16 %v409, %v401
      %v626 = vpack.c.b16 %v410, %v402
      %v627 = vpack.c.b16 %v411, %v403
      %v628 = vpack.c.b16 %v412, %v404
      %v629 = vpack.c.b16 %v413, %v405
      %v630 = vpack.c.b16 %v414, %v406
      %v631 = vpack.c.b16 %v415, %v407
      %v632 = vpack.c.b16 %v424, %v416
      %v633 = vpack.c.b16 %v425, %v417
      %v634 = vpack.c.b16 %v426, %v418
      %v635 = vpack.c.b16 %v427, %v419
      %v636 = vpack.c.b16 %v428, %v420
      %v637 = vpack.c.b16 %v429, %v421
      %v638 = vpack.c.b16 %v430, %v422
      %v639 = vpack.c.b16 %v431, %v423
      %v640 = vpack.c.b16 %v440, %v432
      %v641 = vpack.c.b16 %v441, %v433
      %v642 = vpack.c.b16 %v442, %v434
      %v643 = vpack.c.b16 %v443, %v435
      %v644 = vpack.c.b16 %v444, %v436
      %v645 = vpack.c.b16 %v445, %v437
      %v646 = vpack.c.b16 %v446, %v438
      %v647 = vpack.c.b16 %v447, %v439
      %v648 = vpack.c.b16 %v456, %v448
      %v649 = vpack.c.b16 %v457, %v449
      %v650 = vpack.c.b16 %v458, %v450
      %v651 = vpack.c.b16 %v459, %v451
      %v652 = vpack.c.b16 %v460, %v452
      %v653 = vpack.c.b16 %v461, %v453
      %v654 = vpack.c.b16 %v462, %v454
      %v655 = vpack.c.b16 %v463, %v455
      %v656 = vpack.c.b16 %v472, %v464
      %v657 = vpack.c.b16 %v473, %v465
      %v658 = vpack.c.b16 %v474, %v466
      %v659 = vpack.c.b16 %v475, %v467
      %v660 = vpack.c.b16 %v476, %v468
      %v661 = vpack.c.b16 %v477, %v469
      %v662 = vpack.c.b16 %v478, %v470
      %v663 = vpack.c.b16 %v479, %v471
      %v664 = vpack.c.b16 %v488, %v480
      %v665 = vpack.c.b16 %v489, %v481
      %v666 = vpack.c.b16 %v490, %v482
      %v667 = vpack.c.b16 %v491, %v483
      %v668 = vpack.c.b16 %v492, %v484
      %v669 = vpack.c.b16 %v493, %v485
      %v670 = vpack.c.b16 %v494, %v486
      %v671 = vpack.c.b16 %v495, %v487
      %v672 = vpack.c.b16 %v504, %v496
      %v673 = vpack.c.b16 %v505, %v497
      %v674 = vpack.c.b16 %v506, %v498
      %v675 = vpack.c.b16 %v507, %v499
      %v676 = vpack.c.b16 %v508, %v500
      %v677 = vpack.c.b16 %v509, %v501
      %v678 = vpack.c.b16 %v510, %v502
      %v679 = vpack.c.b16 %v511, %v503
      %v680 = vpack.c.b16 %v520, %v512
      %v681 = vpack.c.b16 %v521, %v513
      %v682 = vpack.c.b16 %v522, %v514
      %v683 = vpack.c.b16 %v523, %v515
      %v684 = vpack.c.b16 %v524, %v516
      %v685 = vpack.c.b16 %v525, %v517
      %v686 = vpack.c.b16 %v526, %v518
      %v687 = vpack.c.b16 %v527, %v519
      %v688 = vpack.c.b16 %v536, %v528
      %v689 = vpack.c.b16 %v537, %v529
      %v690 = vpack.c.b16 %v538, %v530
      %v691 = vpack.c.b16 %v539, %v531
      %v692 = vpack.c.b16 %v540, %v532
      %v693 = vpack.c.b16 %v541, %v533
      %v694 = vpack.c.b16 %v542, %v534
      %v695 = vpack.c.b16 %v543, %v535
      %v696 = vpack.c.b16 %v552, %v544
      %v697 = vpack.c.b16 %v553, %v545
      %v698 = vpack.c.b16 %v554, %v546
      %v699 = vpack.c.b16 %v555, %v547
      %v700 = vpack.c.b16 %v556, %v548
      %v701 = vpack.c.b16 %v557, %v549
      %v702 = vpack.c.b16 %v558, %v550
      %v703 = vpack.c.b16 %v559, %v551
      %v704 = vpack.c.b16 %v568, %v560
      %v705 = vpack.c.b16 %v569, %v561
      %v706 = vpack.c.b16 %v570, %v562
      %v707 = vpack.c.b16 %v571, %v563
      %v708 = vpack.c.b16 %v572, %v564
      %v709 = vpack.c.b16 %v573, %v565
      %v710 = vpack.c.b16 %v574, %v566
      %v711 = vpack.c.b16 %v575, %v567
      %v712 = vpack.c.b16 %v584, %v576
      %v713 = vpack.c.b16 %v585, %v577
      %v714 = vpack.c.b16 %v586, %v578
      %v715 = vpack.c.b16 %v587, %v579
      %v716 = vpack.c.b16 %v588, %v580
      %v717 = vpack.c.b16 %v589, %v581
      %v718 = vpack.c.b16 %v590, %v582
      %v719 = vpack.c.b16 %v591, %v583
      %848 = vmatprep.subr.bf16.mxu0 %v593
      %849 = vmatpush1.bf16.msra.mxu0 %v592
      %850 = vmatprep.subr.bf16.mxu0 %v601
      %851 = vmatpush1.bf16.msra.mxu0 %v600
      %852 = vmatprep.subr.bf16.mxu0 %v609
      %853 = vmatpush1.bf16.msra.mxu0 %v608
      %854 = vmatprep.subr.bf16.mxu0 %v617
      %855 = vmatpush1.bf16.msra.mxu0 %v616
      %856 = vmatprep.subr.bf16.mxu0 %v625
      %857 = vmatpush1.bf16.msra.mxu0 %v624
      %858 = vmatprep.subr.bf16.mxu0 %v633
      %859 = vmatpush1.bf16.msra.mxu0 %v632
      %860 = vmatprep.subr.bf16.mxu0 %v641
      %861 = vmatpush1.bf16.msra.mxu0 %v640
      %862 = vmatprep.subr.bf16.mxu0 %v649
      %863 = vmatpush1.bf16.msra.mxu0 %v648
      %864 = vmatprep.subr.bf16.mxu0 %v657
      %865 = vmatpush1.bf16.msra.mxu0 %v656
      %866 = vmatprep.subr.bf16.mxu0 %v665
      %867 = vmatpush1.bf16.msra.mxu0 %v664
      %868 = vmatprep.subr.bf16.mxu0 %v673
      %869 = vmatpush1.bf16.msra.mxu0 %v672
      %870 = vmatprep.subr.bf16.mxu0 %v681
      %871 = vmatpush1.bf16.msra.mxu0 %v680
      %872 = vmatprep.subr.bf16.mxu0 %v689
      %873 = vmatpush1.bf16.msra.mxu0 %v688
      %874 = vmatprep.subr.bf16.mxu0 %v697
      %875 = vmatpush1.bf16.msra.mxu0 %v696
      %876 = vmatprep.subr.bf16.mxu0 %v705
      %877 = vmatpush1.bf16.msra.mxu0 %v704
      %878 = vmatprep.subr.bf16.mxu0 %v713
      %879 = vmatpush1.bf16.msra.mxu0 %v712
      %880 = vmatprep.mubr.bf16.mxu0 %v79
      %881 = vmatmul.mubr.bf16.gmra.mrb[0].mxu0 %v78
      %v882 = vpop.f32.mrb[0].mxu0
      %v883 = vadd.f32 0.0, %v882
      %v884 = vpop.f32.mrb[0].mxu0
      %v885 = vadd.f32 0.0, %v884
      %v886 = vpop.f32.mrb[0].mxu0
      %v887 = vpop.f32.mrb[0].mxu0
      %888 = vdwg.mxu0
      %889 = vmatprep.subr.bf16.mxu0 %v595
      %890 = vmatpush1.bf16.msra.mxu0 %v594
      %891 = vmatprep.subr.bf16.mxu0 %v603
      %892 = vmatpush1.bf16.msra.mxu0 %v602
      %893 = vmatprep.subr.bf16.mxu0 %v611
      %894 = vmatpush1.bf16.msra.mxu0 %v610
      %895 = vmatprep.subr.bf16.mxu0 %v619
      %896 = vmatpush1.bf16.msra.mxu0 %v618
      %897 = vmatprep.subr.bf16.mxu0 %v627
      %898 = vmatpush1.bf16.msra.mxu0 %v626
      %899 = vmatprep.subr.bf16.mxu0 %v635
      %900 = vmatpush1.bf16.msra.mxu0 %v634
      %901 = vmatprep.subr.bf16.mxu0 %v643
      %902 = vmatpush1.bf16.msra.mxu0 %v642
      %903 = vmatprep.subr.bf16.mxu0 %v651
      %904 = vmatpush1.bf16.msra.mxu0 %v650
      %905 = vmatprep.subr.bf16.mxu0 %v659
      %906 = vmatpush1.bf16.msra.mxu0 %v658
      %907 = vmatprep.subr.bf16.mxu0 %v667
      %908 = vmatpush1.bf16.msra.mxu0 %v666
      %909 = vmatprep.subr.bf16.mxu0 %v675
      %910 = vmatpush1.bf16.msra.mxu0 %v674
      %911 = vmatprep.subr.bf16.mxu0 %v683
      %912 = vmatpush1.bf16.msra.mxu0 %v682
      %913 = vmatprep.subr.bf16.mxu0 %v691
      %914 = vmatpush1.bf16.msra.mxu0 %v690
      %915 = vmatprep.subr.bf16.mxu0 %v699
      %916 = vmatpush1.bf16.msra.mxu0 %v698
      %917 = vmatprep.subr.bf16.mxu0 %v707
      %918 = vmatpush1.bf16.msra.mxu0 %v706
      %919 = vmatprep.subr.bf16.mxu0 %v715
      %920 = vmatpush1.bf16.msra.mxu0 %v714
      %921 = vmatprep.mubr.bf16.mxu0 %v79
      %922 = vmatmul.mubr.bf16.gmra.mrb[0].mxu0 %v78
      %v923 = vpop.f32.mrb[0].mxu0
      %v924 = vadd.f32 0.0, %v923
      %v925 = vpop.f32.mrb[0].mxu0
      %v926 = vadd.f32 0.0, %v925
      %v927 = vpop.f32.mrb[0].mxu0
      %v928 = vpop.f32.mrb[0].mxu0
      %929 = vdwg.mxu0
      %930 = vmatprep.subr.bf16.mxu0 %v597
      %931 = vmatpush1.bf16.msra.mxu0 %v596
      %932 = vmatprep.subr.bf16.mxu0 %v605
      %933 = vmatpush1.bf16.msra.mxu0 %v604
      %934 = vmatprep.subr.bf16.mxu0 %v613
      %935 = vmatpush1.bf16.msra.mxu0 %v612
      %936 = vmatprep.subr.bf16.mxu0 %v621
      %937 = vmatpush1.bf16.msra.mxu0 %v620
      %938 = vmatprep.subr.bf16.mxu0 %v629
      %939 = vmatpush1.bf16.msra.mxu0 %v628
      %940 = vmatprep.subr.bf16.mxu0 %v637
      %941 = vmatpush1.bf16.msra.mxu0 %v636
      %942 = vmatprep.subr.bf16.mxu0 %v645
      %943 = vmatpush1.bf16.msra.mxu0 %v644
      %944 = vmatprep.subr.bf16.mxu0 %v653
      %945 = vmatpush1.bf16.msra.mxu0 %v652
      %946 = vmatprep.subr.bf16.mxu0 %v661
      %947 = vmatpush1.bf16.msra.mxu0 %v660
      %948 = vmatprep.subr.bf16.mxu0 %v669
      %949 = vmatpush1.bf16.msra.mxu0 %v668
      %950 = vmatprep.subr.bf16.mxu0 %v677
      %951 = vmatpush1.bf16.msra.mxu0 %v676
      %952 = vmatprep.subr.bf16.mxu0 %v685
      %953 = vmatpush1.bf16.msra.mxu0 %v684
      %954 = vmatprep.subr.bf16.mxu0 %v693
      %955 = vmatpush1.bf16.msra.mxu0 %v692
      %956 = vmatprep.subr.bf16.mxu0 %v701
      %957 = vmatpush1.bf16.msra.mxu0 %v700
      %958 = vmatprep.subr.bf16.mxu0 %v709
      %959 = vmatpush1.bf16.msra.mxu0 %v708
      %960 = vmatprep.subr.bf16.mxu0 %v717
      %961 = vmatpush1.bf16.msra.mxu0 %v716
      %962 = vmatprep.mubr.bf16.mxu0 %v79
      %963 = vmatmul.mubr.bf16.gmra.mrb[0].mxu0 %v78
      %v964 = vpop.f32.mrb[0].mxu0
      %v965 = vadd.f32 0.0, %v964
      %v966 = vpop.f32.mrb[0].mxu0
      %v967 = vadd.f32 0.0, %v966
      %v968 = vpop.f32.mrb[0].mxu0
      %v969 = vpop.f32.mrb[0].mxu0
      %970 = vdwg.mxu0
      %971 = vmatprep.subr.bf16.mxu0 %v599
      %972 = vmatpush1.bf16.msra.mxu0 %v598
      %973 = vmatprep.subr.bf16.mxu0 %v607
      %974 = vmatpush1.bf16.msra.mxu0 %v606
      %975 = vmatprep.subr.bf16.mxu0 %v615
      %976 = vmatpush1.bf16.msra.mxu0 %v614
      %977 = vmatprep.subr.bf16.mxu0 %v623
      %978 = vmatpush1.bf16.msra.mxu0 %v622
      %979 = vmatprep.subr.bf16.mxu0 %v631
      %980 = vmatpush1.bf16.msra.mxu0 %v630
      %981 = vmatprep.subr.bf16.mxu0 %v639
      %982 = vmatpush1.bf16.msra.mxu0 %v638
      %983 = vmatprep.subr.bf16.mxu0 %v647
      %984 = vmatpush1.bf16.msra.mxu0 %v646
      %985 = vmatprep.subr.bf16.mxu0 %v655
      %986 = vmatpush1.bf16.msra.mxu0 %v654
      %987 = vmatprep.subr.bf16.mxu0 %v663
      %988 = vmatpush1.bf16.msra.mxu0 %v662
      %989 = vmatprep.subr.bf16.mxu0 %v671
      %990 = vmatpush1.bf16.msra.mxu0 %v670
      %991 = vmatprep.subr.bf16.mxu0 %v679
      %992 = vmatpush1.bf16.msra.mxu0 %v678
      %993 = vmatprep.subr.bf16.mxu0 %v687
      %994 = vmatpush1.bf16.msra.mxu0 %v686
      %995 = vmatprep.subr.bf16.mxu0 %v695
      %996 = vmatpush1.bf16.msra.mxu0 %v694
      %997 = vmatprep.subr.bf16.mxu0 %v703
      %998 = vmatpush1.bf16.msra.mxu0 %v702
      %999 = vmatprep.subr.bf16.mxu0 %v711
      %1000 = vmatpush1.bf16.msra.mxu0 %v710
      %1001 = vmatprep.subr.bf16.mxu0 %v719
      %1002 = vmatpush1.bf16.msra.mxu0 %v718
      %1003 = vmatprep.mubr.bf16.mxu0 %v79
      %1004 = vmatmul.mubr.bf16.gmra.mrb[0].mxu0 %v78
      %v1005 = vpop.f32.mrb[0].mxu0
      %v1006 = vadd.f32 0.0, %v1005
      %v1007 = vpop.f32.mrb[0].mxu0
      %v1008 = vadd.f32 0.0, %v1007
      %v1009 = vpop.f32.mrb[0].mxu0
      %v1010 = vpop.f32.mrb[0].mxu0
      %1011 = vdwg.mxu0
      %v1020 = vcombine.low %v883, %v885
      %v1021 = vcombine.low %v924, %v926
      %v1022 = vcombine.low %v965, %v967
      %v1023 = vcombine.low %v1006, %v1008
      %v1028 = vadd.f32 %v71, %v1020
      %v1029 = vadd.f32 %v72, %v1021
      %v1030 = vadd.f32 %v73, %v1022
      %v1031 = vadd.f32 %v74, %v1023
      %v1032 = vmul.f32 %v1028, 0.5
      %v1033 = vmul.f32 %v1029, 0.5
      %v1034 = vmul.f32 %v1030, 0.5
      %v1035 = vtanh.pop %v1032
      %v1036 = vtanh.pop %v1033
      %v1037 = vtanh.pop %v1034
      %v1038 = vmul.f32 %v1035, 0.5
      %v1039 = vmul.f32 %v1036, 0.5
      %v1040 = vmul.f32 %v1037, 0.5
      %v1041 = vadd.f32 %v1038, 0.5
      %v1042 = vadd.f32 %v1039, 0.5
      %v1043 = vadd.f32 %v1040, 0.5
      %v1044 = vtanh.pop %v1031
      %v1045 = vmul.f32 %v1042, %v64
      %v1046 = vmul.f32 %v1041, %v1044
      %v1047 = vadd.f32 %v1045, %v1046
      %v1048 = vtanh.pop %v1047
      %v1049 = vmul.f32 %v1043, %v1048
      %s1050 = sadd.s32 %s65, 1
      %s1051 = smul.u32 %s1050, 8
      %s1052 = smul.addr %s1051, 2
      %s1053 = scalar_lea.vmem [#allocation2], %s1052
      %v1054 = vld [vmem:[%s1053] sm:$0xff]
      %v1055 = vld [vmem:[%s1053 + $0x8] sm:$0xff]
      %v1056 = vunpack.c.l.bf16 %v1054
      %v1057 = vunpack.c.h.bf16 %v1054
      %v1058 = vunpack.c.l.bf16 %v1055
      %v1059 = vunpack.c.h.bf16 %v1055
      %v1061 = vcombine.high %v1049, %v1049
      %v1063 = vpack.c.bf16 %v1049, %v1049
      %v1064 = vpack.c.bf16 %v1061, %v1061
      %1065 = vmatprep.subr.bf16.mxu0 %v593
      %1066 = vmatpush1.bf16.msra.mxu0 %v592
      %1067 = vmatprep.subr.bf16.mxu0 %v601
      %1068 = vmatpush1.bf16.msra.mxu0 %v600
      %1069 = vmatprep.subr.bf16.mxu0 %v609
      %1070 = vmatpush1.bf16.msra.mxu0 %v608
      %1071 = vmatprep.subr.bf16.mxu0 %v617
      %1072 = vmatpush1.bf16.msra.mxu0 %v616
      %1073 = vmatprep.subr.bf16.mxu0 %v625
      %1074 = vmatpush1.bf16.msra.mxu0 %v624
      %1075 = vmatprep.subr.bf16.mxu0 %v633
      %1076 = vmatpush1.bf16.msra.mxu0 %v632
      %1077 = vmatprep.subr.bf16.mxu0 %v641
      %1078 = vmatpush1.bf16.msra.mxu0 %v640
      %1079 = vmatprep.subr.bf16.mxu0 %v649
      %1080 = vmatpush1.bf16.msra.mxu0 %v648
      %1081 = vmatprep.subr.bf16.mxu0 %v657
      %1082 = vmatpush1.bf16.msra.mxu0 %v656
      %1083 = vmatprep.subr.bf16.mxu0 %v665
      %1084 = vmatpush1.bf16.msra.mxu0 %v664
      %1085 = vmatprep.subr.bf16.mxu0 %v673
      %1086 = vmatpush1.bf16.msra.mxu0 %v672
      %1087 = vmatprep.subr.bf16.mxu0 %v681
      %1088 = vmatpush1.bf16.msra.mxu0 %v680
      %1089 = vmatprep.subr.bf16.mxu0 %v689
      %1090 = vmatpush1.bf16.msra.mxu0 %v688
      %1091 = vmatprep.subr.bf16.mxu0 %v697
      %1092 = vmatpush1.bf16.msra.mxu0 %v696
      %1093 = vmatprep.subr.bf16.mxu0 %v705
      %1094 = vmatpush1.bf16.msra.mxu0 %v704
      %1095 = vmatprep.subr.bf16.mxu0 %v713
      %1096 = vmatpush1.bf16.msra.mxu0 %v712
      %1097 = vmatprep.mubr.bf16.mxu0 %v1064
      %1098 = vmatmul.mubr.bf16.gmra.mrb[0].mxu0 %v1063
      %v1099 = vpop.f32.mrb[0].mxu0
      %v1100 = vadd.f32 0.0, %v1099
      %v1101 = vpop.f32.mrb[0].mxu0
      %v1102 = vadd.f32 0.0, %v1101
      %v1103 = vpop.f32.mrb[0].mxu0
      %v1104 = vpop.f32.mrb[0].mxu0
      %1105 = vdwg.mxu0
      %1106 = vmatprep.subr.bf16.mxu0 %v595
      %1107 = vmatpush1.bf16.msra.mxu0 %v594
      %1108 = vmatprep.subr.bf16.mxu0 %v603
      %1109 = vmatpush1.bf16.msra.mxu0 %v602
      %1110 = vmatprep.subr.bf16.mxu0 %v611
      %1111 = vmatpush1.bf16.msra.mxu0 %v610
      %1112 = vmatprep.subr.bf16.mxu0 %v619
      %1113 = vmatpush1.bf16.msra.mxu0 %v618
      %1114 = vmatprep.subr.bf16.mxu0 %v627
      %1115 = vmatpush1.bf16.msra.mxu0 %v626
      %1116 = vmatprep.subr.bf16.mxu0 %v635
      %1117 = vmatpush1.bf16.msra.mxu0 %v634
      %1118 = vmatprep.subr.bf16.mxu0 %v643
      %1119 = vmatpush1.bf16.msra.mxu0 %v642
      %1120 = vmatprep.subr.bf16.mxu0 %v651
      %1121 = vmatpush1.bf16.msra.mxu0 %v650
      %1122 = vmatprep.subr.bf16.mxu0 %v659
      %1123 = vmatpush1.bf16.msra.mxu0 %v658
      %1124 = vmatprep.subr.bf16.mxu0 %v667
      %1125 = vmatpush1.bf16.msra.mxu0 %v666
      %1126 = vmatprep.subr.bf16.mxu0 %v675
      %1127 = vmatpush1.bf16.msra.mxu0 %v674
      %1128 = vmatprep.subr.bf16.mxu0 %v683
      %1129 = vmatpush1.bf16.msra.mxu0 %v682
      %1130 = vmatprep.subr.bf16.mxu0 %v691
      %1131 = vmatpush1.bf16.msra.mxu0 %v690
      %1132 = vmatprep.subr.bf16.mxu0 %v699
      %1133 = vmatpush1.bf16.msra.mxu0 %v698
      %1134 = vmatprep.subr.bf16.mxu0 %v707
      %1135 = vmatpush1.bf16.msra.mxu0 %v706
      %1136 = vmatprep.subr.bf16.mxu0 %v715
      %1137 = vmatpush1.bf16.msra.mxu0 %v714
      %1138 = vmatprep.mubr.bf16.mxu0 %v1064
      %1139 = vmatmul.mubr.bf16.gmra.mrb[0].mxu0 %v1063
      %v1140 = vpop.f32.mrb[0].mxu0
      %v1141 = vadd.f32 0.0, %v1140
      %v1142 = vpop.f32.mrb[0].mxu0
      %v1143 = vadd.f32 0.0, %v1142
      %v1144 = vpop.f32.mrb[0].mxu0
      %v1145 = vpop.f32.mrb[0].mxu0
      %1146 = vdwg.mxu0
      %1147 = vmatprep.subr.bf16.mxu0 %v597
      %1148 = vmatpush1.bf16.msra.mxu0 %v596
      %1149 = vmatprep.subr.bf16.mxu0 %v605
      %1150 = vmatpush1.bf16.msra.mxu0 %v604
      %1151 = vmatprep.subr.bf16.mxu0 %v613
      %1152 = vmatpush1.bf16.msra.mxu0 %v612
      %1153 = vmatprep.subr.bf16.mxu0 %v621
      %1154 = vmatpush1.bf16.msra.mxu0 %v620
      %1155 = vmatprep.subr.bf16.mxu0 %v629
      %1156 = vmatpush1.bf16.msra.mxu0 %v628
      %1157 = vmatprep.subr.bf16.mxu0 %v637
      %1158 = vmatpush1.bf16.msra.mxu0 %v636
      %1159 = vmatprep.subr.bf16.mxu0 %v645
      %1160 = vmatpush1.bf16.msra.mxu0 %v644
      %1161 = vmatprep.subr.bf16.mxu0 %v653
      %1162 = vmatpush1.bf16.msra.mxu0 %v652
      %1163 = vmatprep.subr.bf16.mxu0 %v661
      %1164 = vmatpush1.bf16.msra.mxu0 %v660
      %1165 = vmatprep.subr.bf16.mxu0 %v669
      %1166 = vmatpush1.bf16.msra.mxu0 %v668
      %1167 = vmatprep.subr.bf16.mxu0 %v677
      %1168 = vmatpush1.bf16.msra.mxu0 %v676
      %1169 = vmatprep.subr.bf16.mxu0 %v685
      %1170 = vmatpush1.bf16.msra.mxu0 %v684
      %1171 = vmatprep.subr.bf16.mxu0 %v693
      %1172 = vmatpush1.bf16.msra.mxu0 %v692
      %1173 = vmatprep.subr.bf16.mxu0 %v701
      %1174 = vmatpush1.bf16.msra.mxu0 %v700
      %1175 = vmatprep.subr.bf16.mxu0 %v709
      %1176 = vmatpush1.bf16.msra.mxu0 %v708
      %1177 = vmatprep.subr.bf16.mxu0 %v717
      %1178 = vmatpush1.bf16.msra.mxu0 %v716
      %1179 = vmatprep.mubr.bf16.mxu0 %v1064
      %1180 = vmatmul.mubr.bf16.gmra.mrb[0].mxu0 %v1063
      %v1181 = vpop.f32.mrb[0].mxu0
      %v1182 = vadd.f32 0.0, %v1181
      %v1183 = vpop.f32.mrb[0].mxu0
      %v1184 = vadd.f32 0.0, %v1183
      %v1185 = vpop.f32.mrb[0].mxu0
      %v1186 = vpop.f32.mrb[0].mxu0
      %1187 = vdwg.mxu0
      %1188 = vmatprep.subr.bf16.mxu0 %v599
      %1189 = vmatpush1.bf16.msra.mxu0 %v598
      %1190 = vmatprep.subr.bf16.mxu0 %v607
      %1191 = vmatpush1.bf16.msra.mxu0 %v606
      %1192 = vmatprep.subr.bf16.mxu0 %v615
      %1193 = vmatpush1.bf16.msra.mxu0 %v614
      %1194 = vmatprep.subr.bf16.mxu0 %v623
      %1195 = vmatpush1.bf16.msra.mxu0 %v622
      %1196 = vmatprep.subr.bf16.mxu0 %v631
      %1197 = vmatpush1.bf16.msra.mxu0 %v630
      %1198 = vmatprep.subr.bf16.mxu0 %v639
      %1199 = vmatpush1.bf16.msra.mxu0 %v638
      %1200 = vmatprep.subr.bf16.mxu0 %v647
      %1201 = vmatpush1.bf16.msra.mxu0 %v646
      %1202 = vmatprep.subr.bf16.mxu0 %v655
      %1203 = vmatpush1.bf16.msra.mxu0 %v654
      %1204 = vmatprep.subr.bf16.mxu0 %v663
      %1205 = vmatpush1.bf16.msra.mxu0 %v662
      %1206 = vmatprep.subr.bf16.mxu0 %v671
      %1207 = vmatpush1.bf16.msra.mxu0 %v670
      %1208 = vmatprep.subr.bf16.mxu0 %v679
      %1209 = vmatpush1.bf16.msra.mxu0 %v678
      %1210 = vmatprep.subr.bf16.mxu0 %v687
      %1211 = vmatpush1.bf16.msra.mxu0 %v686
      %1212 = vmatprep.subr.bf16.mxu0 %v695
      %1213 = vmatpush1.bf16.msra.mxu0 %v694
      %1214 = vmatprep.subr.bf16.mxu0 %v703
      %1215 = vmatpush1.bf16.msra.mxu0 %v702
      %1216 = vmatprep.subr.bf16.mxu0 %v711
      %1217 = vmatpush1.bf16.msra.mxu0 %v710
      %1218 = vmatprep.subr.bf16.mxu0 %v719
      %1219 = vmatpush1.bf16.msra.mxu0 %v718
      %1220 = vmatprep.mubr.bf16.mxu0 %v1064
      %1221 = vmatmul.mubr.bf16.gmra.mrb[0].mxu0 %v1063
      %v1222 = vpop.f32.mrb[0].mxu0
      %v1223 = vadd.f32 0.0, %v1222
      %v1224 = vpop.f32.mrb[0].mxu0
      %v1225 = vadd.f32 0.0, %v1224
      %v1226 = vpop.f32.mrb[0].mxu0
      %v1227 = vpop.f32.mrb[0].mxu0
      %1228 = vdwg.mxu0
      %v1237 = vcombine.low %v1100, %v1102
      %v1238 = vcombine.low %v1141, %v1143
      %v1239 = vcombine.low %v1182, %v1184
      %v1240 = vcombine.low %v1223, %v1225
      %v1245 = vadd.f32 %v1056, %v1237
      %v1246 = vadd.f32 %v1057, %v1238
      %v1247 = vadd.f32 %v1058, %v1239
      %v1248 = vadd.f32 %v1059, %v1240
      %v1249 = vmul.f32 %v1245, 0.5
      %v1250 = vmul.f32 %v1246, 0.5
      %v1251 = vmul.f32 %v1247, 0.5
      %v1252 = vtanh.pop %v1249
      %v1253 = vtanh.pop %v1250
      %v1254 = vtanh.pop %v1251
      %v1255 = vmul.f32 %v1252, 0.5
      %v1256 = vmul.f32 %v1253, 0.5
      %v1257 = vmul.f32 %v1254, 0.5
      %v1258 = vadd.f32 %v1255, 0.5
      %v1259 = vadd.f32 %v1256, 0.5
      %v1260 = vadd.f32 %v1257, 0.5
      %v1261 = vtanh.pop %v1248
      %v1262 = vmul.f32 %v1259, %v1047
      %v1263 = vmul.f32 %v1258, %v1261
      %v1264 = vadd.f32 %v1262, %v1263
      %v1265 = vtanh.pop %v1264
      %v1266 = vmul.f32 %v1260, %v1265
      %s1267 = sadd.s32 %s65, 2
      %s1268 = smul.u32 %s1267, 8
      %s1269 = smul.addr %s1268, 2
      %s1270 = scalar_lea.vmem [#allocation2], %s1269
      %v1271 = vld [vmem:[%s1270] sm:$0xff]
      %v1272 = vld [vmem:[%s1270 + $0x8] sm:$0xff]
      %v1273 = vunpack.c.l.bf16 %v1271
      %v1274 = vunpack.c.h.bf16 %v1271
      %v1275 = vunpack.c.l.bf16 %v1272
      %v1276 = vunpack.c.h.bf16 %v1272
      %v1278 = vcombine.high %v1266, %v1266
      %v1280 = vpack.c.bf16 %v1266, %v1266
      %v1281 = vpack.c.bf16 %v1278, %v1278
      %1282 = vmatprep.subr.bf16.mxu0 %v593
      %1283 = vmatpush1.bf16.msra.mxu0 %v592
      %1284 = vmatprep.subr.bf16.mxu0 %v601
      %1285 = vmatpush1.bf16.msra.mxu0 %v600
      %1286 = vmatprep.subr.bf16.mxu0 %v609
      %1287 = vmatpush1.bf16.msra.mxu0 %v608
      %1288 = vmatprep.subr.bf16.mxu0 %v617
      %1289 = vmatpush1.bf16.msra.mxu0 %v616
      %1290 = vmatprep.subr.bf16.mxu0 %v625
      %1291 = vmatpush1.bf16.msra.mxu0 %v624
      %1292 = vmatprep.subr.bf16.mxu0 %v633
      %1293 = vmatpush1.bf16.msra.mxu0 %v632
      %1294 = vmatprep.subr.bf16.mxu0 %v641
      %1295 = vmatpush1.bf16.msra.mxu0 %v640
      %1296 = vmatprep.subr.bf16.mxu0 %v649
      %1297 = vmatpush1.bf16.msra.mxu0 %v648
      %1298 = vmatprep.subr.bf16.mxu0 %v657
      %1299 = vmatpush1.bf16.msra.mxu0 %v656
      %1300 = vmatprep.subr.bf16.mxu0 %v665
      %1301 = vmatpush1.bf16.msra.mxu0 %v664
      %1302 = vmatprep.subr.bf16.mxu0 %v673
      %1303 = vmatpush1.bf16.msra.mxu0 %v672
      %1304 = vmatprep.subr.bf16.mxu0 %v681
      %1305 = vmatpush1.bf16.msra.mxu0 %v680
      %1306 = vmatprep.subr.bf16.mxu0 %v689
      %1307 = vmatpush1.bf16.msra.mxu0 %v688
      %1308 = vmatprep.subr.bf16.mxu0 %v697
      %1309 = vmatpush1.bf16.msra.mxu0 %v696
      %1310 = vmatprep.subr.bf16.mxu0 %v705
      %1311 = vmatpush1.bf16.msra.mxu0 %v704
      %1312 = vmatprep.subr.bf16.mxu0 %v713
      %1313 = vmatpush1.bf16.msra.mxu0 %v712
      %1314 = vmatprep.mubr.bf16.mxu0 %v1281
      %1315 = vmatmul.mubr.bf16.gmra.mrb[0].mxu0 %v1280
      %v1316 = vpop.f32.mrb[0].mxu0
      %v1317 = vadd.f32 0.0, %v1316
      %v1318 = vpop.f32.mrb[0].mxu0
      %v1319 = vadd.f32 0.0, %v1318
      %v1320 = vpop.f32.mrb[0].mxu0
      %v1321 = vpop.f32.mrb[0].mxu0
      %1322 = vdwg.mxu0
      %1323 = vmatprep.subr.bf16.mxu0 %v595
      %1324 = vmatpush1.bf16.msra.mxu0 %v594
      %1325 = vmatprep.subr.bf16.mxu0 %v603
      %1326 = vmatpush1.bf16.msra.mxu0 %v602
      %1327 = vmatprep.subr.bf16.mxu0 %v611
      %1328 = vmatpush1.bf16.msra.mxu0 %v610
      %1329 = vmatprep.subr.bf16.mxu0 %v619
      %1330 = vmatpush1.bf16.msra.mxu0 %v618
      %1331 = vmatprep.subr.bf16.mxu0 %v627
      %1332 = vmatpush1.bf16.msra.mxu0 %v626
      %1333 = vmatprep.subr.bf16.mxu0 %v635
      %1334 = vmatpush1.bf16.msra.mxu0 %v634
      %1335 = vmatprep.subr.bf16.mxu0 %v643
      %1336 = vmatpush1.bf16.msra.mxu0 %v642
      %1337 = vmatprep.subr.bf16.mxu0 %v651
      %1338 = vmatpush1.bf16.msra.mxu0 %v650
      %1339 = vmatprep.subr.bf16.mxu0 %v659
      %1340 = vmatpush1.bf16.msra.mxu0 %v658
      %1341 = vmatprep.subr.bf16.mxu0 %v667
      %1342 = vmatpush1.bf16.msra.mxu0 %v666
      %1343 = vmatprep.subr.bf16.mxu0 %v675
      %1344 = vmatpush1.bf16.msra.mxu0 %v674
      %1345 = vmatprep.subr.bf16.mxu0 %v683
      %1346 = vmatpush1.bf16.msra.mxu0 %v682
      %1347 = vmatprep.subr.bf16.mxu0 %v691
      %1348 = vmatpush1.bf16.msra.mxu0 %v690
      %1349 = vmatprep.subr.bf16.mxu0 %v699
      %1350 = vmatpush1.bf16.msra.mxu0 %v698
      %1351 = vmatprep.subr.bf16.mxu0 %v707
      %1352 = vmatpush1.bf16.msra.mxu0 %v706
      %1353 = vmatprep.subr.bf16.mxu0 %v715
      %1354 = vmatpush1.bf16.msra.mxu0 %v714
      %1355 = vmatprep.mubr.bf16.mxu0 %v1281
      %1356 = vmatmul.mubr.bf16.gmra.mrb[0].mxu0 %v1280
      %v1357 = vpop.f32.mrb[0].mxu0
      %v1358 = vadd.f32 0.0, %v1357
      %v1359 = vpop.f32.mrb[0].mxu0
      %v1360 = vadd.f32 0.0, %v1359
      %v1361 = vpop.f32.mrb[0].mxu0
      %v1362 = vpop.f32.mrb[0].mxu0
      %1363 = vdwg.mxu0
      %1364 = vmatprep.subr.bf16.mxu0 %v597
      %1365 = vmatpush1.bf16.msra.mxu0 %v596
      %1366 = vmatprep.subr.bf16.mxu0 %v605
      %1367 = vmatpush1.bf16.msra.mxu0 %v604
      %1368 = vmatprep.subr.bf16.mxu0 %v613
      %1369 = vmatpush1.bf16.msra.mxu0 %v612
      %1370 = vmatprep.subr.bf16.mxu0 %v621
      %1371 = vmatpush1.bf16.msra.mxu0 %v620
      %1372 = vmatprep.subr.bf16.mxu0 %v629
      %1373 = vmatpush1.bf16.msra.mxu0 %v628
      %1374 = vmatprep.subr.bf16.mxu0 %v637
      %1375 = vmatpush1.bf16.msra.mxu0 %v636
      %1376 = vmatprep.subr.bf16.mxu0 %v645
      %1377 = vmatpush1.bf16.msra.mxu0 %v644
      %1378 = vmatprep.subr.bf16.mxu0 %v653
      %1379 = vmatpush1.bf16.msra.mxu0 %v652
      %1380 = vmatprep.subr.bf16.mxu0 %v661
      %1381 = vmatpush1.bf16.msra.mxu0 %v660
      %1382 = vmatprep.subr.bf16.mxu0 %v669
      %1383 = vmatpush1.bf16.msra.mxu0 %v668
      %1384 = vmatprep.subr.bf16.mxu0 %v677
      %1385 = vmatpush1.bf16.msra.mxu0 %v676
      %1386 = vmatprep.subr.bf16.mxu0 %v685
      %1387 = vmatpush1.bf16.msra.mxu0 %v684
      %1388 = vmatprep.subr.bf16.mxu0 %v693
      %1389 = vmatpush1.bf16.msra.mxu0 %v692
      %1390 = vmatprep.subr.bf16.mxu0 %v701
      %1391 = vmatpush1.bf16.msra.mxu0 %v700
      %1392 = vmatprep.subr.bf16.mxu0 %v709
      %1393 = vmatpush1.bf16.msra.mxu0 %v708
      %1394 = vmatprep.subr.bf16.mxu0 %v717
      %1395 = vmatpush1.bf16.msra.mxu0 %v716
      %1396 = vmatprep.mubr.bf16.mxu0 %v1281
      %1397 = vmatmul.mubr.bf16.gmra.mrb[0].mxu0 %v1280
      %v1398 = vpop.f32.mrb[0].mxu0
      %v1399 = vadd.f32 0.0, %v1398
      %v1400 = vpop.f32.mrb[0].mxu0
      %v1401 = vadd.f32 0.0, %v1400
      %v1402 = vpop.f32.mrb[0].mxu0
      %v1403 = vpop.f32.mrb[0].mxu0
      %1404 = vdwg.mxu0
      %1405 = vmatprep.subr.bf16.mxu0 %v599
      %1406 = vmatpush1.bf16.msra.mxu0 %v598
      %1407 = vmatprep.subr.bf16.mxu0 %v607
      %1408 = vmatpush1.bf16.msra.mxu0 %v606
      %1409 = vmatprep.subr.bf16.mxu0 %v615
      %1410 = vmatpush1.bf16.msra.mxu0 %v614
      %1411 = vmatprep.subr.bf16.mxu0 %v623
      %1412 = vmatpush1.bf16.msra.mxu0 %v622
      %1413 = vmatprep.subr.bf16.mxu0 %v631
      %1414 = vmatpush1.bf16.msra.mxu0 %v630
      %1415 = vmatprep.subr.bf16.mxu0 %v639
      %1416 = vmatpush1.bf16.msra.mxu0 %v638
      %1417 = vmatprep.subr.bf16.mxu0 %v647
      %1418 = vmatpush1.bf16.msra.mxu0 %v646
      %1419 = vmatprep.subr.bf16.mxu0 %v655
      %1420 = vmatpush1.bf16.msra.mxu0 %v654
      %1421 = vmatprep.subr.bf16.mxu0 %v663
      %1422 = vmatpush1.bf16.msra.mxu0 %v662
      %1423 = vmatprep.subr.bf16.mxu0 %v671
      %1424 = vmatpush1.bf16.msra.mxu0 %v670
      %1425 = vmatprep.subr.bf16.mxu0 %v679
      %1426 = vmatpush1.bf16.msra.mxu0 %v678
      %1427 = vmatprep.subr.bf16.mxu0 %v687
      %1428 = vmatpush1.bf16.msra.mxu0 %v686
      %1429 = vmatprep.subr.bf16.mxu0 %v695
      %1430 = vmatpush1.bf16.msra.mxu0 %v694
      %1431 = vmatprep.subr.bf16.mxu0 %v703
      %1432 = vmatpush1.bf16.msra.mxu0 %v702
      %1433 = vmatprep.subr.bf16.mxu0 %v711
      %1434 = vmatpush1.bf16.msra.mxu0 %v710
      %1435 = vmatprep.subr.bf16.mxu0 %v719
      %1436 = vmatpush1.bf16.msra.mxu0 %v718
      %1437 = vmatprep.mubr.bf16.mxu0 %v1281
      %1438 = vmatmul.mubr.bf16.gmra.mrb[0].mxu0 %v1280
      %v1439 = vpop.f32.mrb[0].mxu0
      %v1440 = vadd.f32 0.0, %v1439
      %v1441 = vpop.f32.mrb[0].mxu0
      %v1442 = vadd.f32 0.0, %v1441
      %v1443 = vpop.f32.mrb[0].mxu0
      %v1444 = vpop.f32.mrb[0].mxu0
      %1445 = vdwg.mxu0
      %v1454 = vcombine.low %v1317, %v1319
      %v1455 = vcombine.low %v1358, %v1360
      %v1456 = vcombine.low %v1399, %v1401
      %v1457 = vcombine.low %v1440, %v1442
      %v1462 = vadd.f32 %v1273, %v1454
      %v1463 = vadd.f32 %v1274, %v1455
      %v1464 = vadd.f32 %v1275, %v1456
      %v1465 = vadd.f32 %v1276, %v1457
      %v1466 = vmul.f32 %v1462, 0.5
      %v1467 = vmul.f32 %v1463, 0.5
      %v1468 = vmul.f32 %v1464, 0.5
      %v1469 = vtanh.pop %v1466
      %v1470 = vtanh.pop %v1467
      %v1471 = vtanh.pop %v1468
      %v1472 = vmul.f32 %v1469, 0.5
      %v1473 = vmul.f32 %v1470, 0.5
      %v1474 = vmul.f32 %v1471, 0.5
      %v1475 = vadd.f32 %v1472, 0.5
      %v1476 = vadd.f32 %v1473, 0.5
      %v1477 = vadd.f32 %v1474, 0.5
      %v1478 = vtanh.pop %v1465
      %v1479 = vmul.f32 %v1476, %v1264
      %v1480 = vmul.f32 %v1475, %v1478
      %v1481 = vadd.f32 %v1479, %v1480
      %v1482 = vtanh.pop %v1481
      %v1483 = vmul.f32 %v1477, %v1482
      %s1484 = sadd.s32 %s65, 3
      %s1485 = smul.u32 %s1484, 8
      %s1486 = smul.addr %s1485, 2
      %s1487 = scalar_lea.vmem [#allocation2], %s1486
      %v1488 = vld [vmem:[%s1487] sm:$0xff]
      %v1489 = vld [vmem:[%s1487 + $0x8] sm:$0xff]
      %v1490 = vunpack.c.l.bf16 %v1488
      %v1491 = vunpack.c.h.bf16 %v1488
      %v1492 = vunpack.c.l.bf16 %v1489
      %v1493 = vunpack.c.h.bf16 %v1489
      %v1495 = vcombine.high %v1483, %v1483
      %v1497 = vpack.c.bf16 %v1483, %v1483
      %v1498 = vpack.c.bf16 %v1495, %v1495
      %1499 = vmatprep.subr.bf16.mxu0 %v593
      %1500 = vmatpush1.bf16.msra.mxu0 %v592
      %1501 = vmatprep.subr.bf16.mxu0 %v601
      %1502 = vmatpush1.bf16.msra.mxu0 %v600
      %1503 = vmatprep.subr.bf16.mxu0 %v609
      %1504 = vmatpush1.bf16.msra.mxu0 %v608
      %1505 = vmatprep.subr.bf16.mxu0 %v617
      %1506 = vmatpush1.bf16.msra.mxu0 %v616
      %1507 = vmatprep.subr.bf16.mxu0 %v625
      %1508 = vmatpush1.bf16.msra.mxu0 %v624
      %1509 = vmatprep.subr.bf16.mxu0 %v633
      %1510 = vmatpush1.bf16.msra.mxu0 %v632
      %1511 = vmatprep.subr.bf16.mxu0 %v641
      %1512 = vmatpush1.bf16.msra.mxu0 %v640
      %1513 = vmatprep.subr.bf16.mxu0 %v649
      %1514 = vmatpush1.bf16.msra.mxu0 %v648
      %1515 = vmatprep.subr.bf16.mxu0 %v657
      %1516 = vmatpush1.bf16.msra.mxu0 %v656
      %1517 = vmatprep.subr.bf16.mxu0 %v665
      %1518 = vmatpush1.bf16.msra.mxu0 %v664
      %1519 = vmatprep.subr.bf16.mxu0 %v673
      %1520 = vmatpush1.bf16.msra.mxu0 %v672
      %1521 = vmatprep.subr.bf16.mxu0 %v681
      %1522 = vmatpush1.bf16.msra.mxu0 %v680
      %1523 = vmatprep.subr.bf16.mxu0 %v689
      %1524 = vmatpush1.bf16.msra.mxu0 %v688
      %1525 = vmatprep.subr.bf16.mxu0 %v697
      %1526 = vmatpush1.bf16.msra.mxu0 %v696
      %1527 = vmatprep.subr.bf16.mxu0 %v705
      %1528 = vmatpush1.bf16.msra.mxu0 %v704
      %1529 = vmatprep.subr.bf16.mxu0 %v713
      %1530 = vmatpush1.bf16.msra.mxu0 %v712
      %1531 = vmatprep.mubr.bf16.mxu0 %v1498
      %1532 = vmatmul.mubr.bf16.gmra.mrb[0].mxu0 %v1497
      %v1533 = vpop.f32.mrb[0].mxu0
      %v1534 = vadd.f32 0.0, %v1533
      %v1535 = vpop.f32.mrb[0].mxu0
      %v1536 = vadd.f32 0.0, %v1535
      %v1537 = vpop.f32.mrb[0].mxu0
      %v1538 = vpop.f32.mrb[0].mxu0
      %1539 = vdwg.mxu0
      %1540 = vmatprep.subr.bf16.mxu0 %v595
      %1541 = vmatpush1.bf16.msra.mxu0 %v594
      %1542 = vmatprep.subr.bf16.mxu0 %v603
      %1543 = vmatpush1.bf16.msra.mxu0 %v602
      %1544 = vmatprep.subr.bf16.mxu0 %v611
      %1545 = vmatpush1.bf16.msra.mxu0 %v610
      %1546 = vmatprep.subr.bf16.mxu0 %v619
      %1547 = vmatpush1.bf16.msra.mxu0 %v618
      %1548 = vmatprep.subr.bf16.mxu0 %v627
      %1549 = vmatpush1.bf16.msra.mxu0 %v626
      %1550 = vmatprep.subr.bf16.mxu0 %v635
      %1551 = vmatpush1.bf16.msra.mxu0 %v634
      %1552 = vmatprep.subr.bf16.mxu0 %v643
      %1553 = vmatpush1.bf16.msra.mxu0 %v642
      %1554 = vmatprep.subr.bf16.mxu0 %v651
      %1555 = vmatpush1.bf16.msra.mxu0 %v650
      %1556 = vmatprep.subr.bf16.mxu0 %v659
      %1557 = vmatpush1.bf16.msra.mxu0 %v658
      %1558 = vmatprep.subr.bf16.mxu0 %v667
      %1559 = vmatpush1.bf16.msra.mxu0 %v666
      %1560 = vmatprep.subr.bf16.mxu0 %v675
      %1561 = vmatpush1.bf16.msra.mxu0 %v674
      %1562 = vmatprep.subr.bf16.mxu0 %v683
      %1563 = vmatpush1.bf16.msra.mxu0 %v682
      %1564 = vmatprep.subr.bf16.mxu0 %v691
      %1565 = vmatpush1.bf16.msra.mxu0 %v690
      %1566 = vmatprep.subr.bf16.mxu0 %v699
      %1567 = vmatpush1.bf16.msra.mxu0 %v698
      %1568 = vmatprep.subr.bf16.mxu0 %v707
      %1569 = vmatpush1.bf16.msra.mxu0 %v706
      %1570 = vmatprep.subr.bf16.mxu0 %v715
      %1571 = vmatpush1.bf16.msra.mxu0 %v714
      %1572 = vmatprep.mubr.bf16.mxu0 %v1498
      %1573 = vmatmul.mubr.bf16.gmra.mrb[0].mxu0 %v1497
      %v1574 = vpop.f32.mrb[0].mxu0
      %v1575 = vadd.f32 0.0, %v1574
      %v1576 = vpop.f32.mrb[0].mxu0
      %v1577 = vadd.f32 0.0, %v1576
      %v1578 = vpop.f32.mrb[0].mxu0
      %v1579 = vpop.f32.mrb[0].mxu0
      %1580 = vdwg.mxu0
      %1581 = vmatprep.subr.bf16.mxu0 %v597
      %1582 = vmatpush1.bf16.msra.mxu0 %v596
      %1583 = vmatprep.subr.bf16.mxu0 %v605
      %1584 = vmatpush1.bf16.msra.mxu0 %v604
      %1585 = vmatprep.subr.bf16.mxu0 %v613
      %1586 = vmatpush1.bf16.msra.mxu0 %v612
      %1587 = vmatprep.subr.bf16.mxu0 %v621
      %1588 = vmatpush1.bf16.msra.mxu0 %v620
      %1589 = vmatprep.subr.bf16.mxu0 %v629
      %1590 = vmatpush1.bf16.msra.mxu0 %v628
      %1591 = vmatprep.subr.bf16.mxu0 %v637
      %1592 = vmatpush1.bf16.msra.mxu0 %v636
      %1593 = vmatprep.subr.bf16.mxu0 %v645
      %1594 = vmatpush1.bf16.msra.mxu0 %v644
      %1595 = vmatprep.subr.bf16.mxu0 %v653
      %1596 = vmatpush1.bf16.msra.mxu0 %v652
      %1597 = vmatprep.subr.bf16.mxu0 %v661
      %1598 = vmatpush1.bf16.msra.mxu0 %v660
      %1599 = vmatprep.subr.bf16.mxu0 %v669
      %1600 = vmatpush1.bf16.msra.mxu0 %v668
      %1601 = vmatprep.subr.bf16.mxu0 %v677
      %1602 = vmatpush1.bf16.msra.mxu0 %v676
      %1603 = vmatprep.subr.bf16.mxu0 %v685
      %1604 = vmatpush1.bf16.msra.mxu0 %v684
      %1605 = vmatprep.subr.bf16.mxu0 %v693
      %1606 = vmatpush1.bf16.msra.mxu0 %v692
      %1607 = vmatprep.subr.bf16.mxu0 %v701
      %1608 = vmatpush1.bf16.msra.mxu0 %v700
      %1609 = vmatprep.subr.bf16.mxu0 %v709
      %1610 = vmatpush1.bf16.msra.mxu0 %v708
      %1611 = vmatprep.subr.bf16.mxu0 %v717
      %1612 = vmatpush1.bf16.msra.mxu0 %v716
      %1613 = vmatprep.mubr.bf16.mxu0 %v1498
      %1614 = vmatmul.mubr.bf16.gmra.mrb[0].mxu0 %v1497
      %v1615 = vpop.f32.mrb[0].mxu0
      %v1616 = vadd.f32 0.0, %v1615
      %v1617 = vpop.f32.mrb[0].mxu0
      %v1618 = vadd.f32 0.0, %v1617
      %v1619 = vpop.f32.mrb[0].mxu0
      %v1620 = vpop.f32.mrb[0].mxu0
      %1621 = vdwg.mxu0
      %1622 = vmatprep.subr.bf16.mxu0 %v599
      %1623 = vmatpush1.bf16.msra.mxu0 %v598
      %1624 = vmatprep.subr.bf16.mxu0 %v607
      %1625 = vmatpush1.bf16.msra.mxu0 %v606
      %1626 = vmatprep.subr.bf16.mxu0 %v615
      %1627 = vmatpush1.bf16.msra.mxu0 %v614
      %1628 = vmatprep.subr.bf16.mxu0 %v623
      %1629 = vmatpush1.bf16.msra.mxu0 %v622
      %1630 = vmatprep.subr.bf16.mxu0 %v631
      %1631 = vmatpush1.bf16.msra.mxu0 %v630
      %1632 = vmatprep.subr.bf16.mxu0 %v639
      %1633 = vmatpush1.bf16.msra.mxu0 %v638
      %1634 = vmatprep.subr.bf16.mxu0 %v647
      %1635 = vmatpush1.bf16.msra.mxu0 %v646
      %1636 = vmatprep.subr.bf16.mxu0 %v655
      %1637 = vmatpush1.bf16.msra.mxu0 %v654
      %1638 = vmatprep.subr.bf16.mxu0 %v663
      %1639 = vmatpush1.bf16.msra.mxu0 %v662
      %1640 = vmatprep.subr.bf16.mxu0 %v671
      %1641 = vmatpush1.bf16.msra.mxu0 %v670
      %1642 = vmatprep.subr.bf16.mxu0 %v679
      %1643 = vmatpush1.bf16.msra.mxu0 %v678
      %1644 = vmatprep.subr.bf16.mxu0 %v687
      %1645 = vmatpush1.bf16.msra.mxu0 %v686
      %1646 = vmatprep.subr.bf16.mxu0 %v695
      %1647 = vmatpush1.bf16.msra.mxu0 %v694
      %1648 = vmatprep.subr.bf16.mxu0 %v703
      %1649 = vmatpush1.bf16.msra.mxu0 %v702
      %1650 = vmatprep.subr.bf16.mxu0 %v711
      %1651 = vmatpush1.bf16.msra.mxu0 %v710
      %1652 = vmatprep.subr.bf16.mxu0 %v719
      %1653 = vmatpush1.bf16.msra.mxu0 %v718
      %1654 = vmatprep.mubr.bf16.mxu0 %v1498
      %1655 = vmatmul.mubr.bf16.gmra.mrb[0].mxu0 %v1497
      %v1656 = vpop.f32.mrb[0].mxu0
      %v1657 = vadd.f32 0.0, %v1656
      %v1658 = vpop.f32.mrb[0].mxu0
      %v1659 = vadd.f32 0.0, %v1658
      %v1660 = vpop.f32.mrb[0].mxu0
      %v1661 = vpop.f32.mrb[0].mxu0
      %1662 = vdwg.mxu0
      %v1671 = vcombine.low %v1534, %v1536
      %v1672 = vcombine.low %v1575, %v1577
      %v1673 = vcombine.low %v1616, %v1618
      %v1674 = vcombine.low %v1657, %v1659
      %v1679 = vadd.f32 %v1490, %v1671
      %v1680 = vadd.f32 %v1491, %v1672
      %v1681 = vadd.f32 %v1492, %v1673
      %v1682 = vadd.f32 %v1493, %v1674
      %v1683 = vmul.f32 %v1679, 0.5
      %v1684 = vmul.f32 %v1680, 0.5
      %v1685 = vmul.f32 %v1681, 0.5
      %v1686 = vtanh.pop %v1683
      %v1687 = vtanh.pop %v1684
      %v1688 = vtanh.pop %v1685
      %v1689 = vmul.f32 %v1686, 0.5
      %v1690 = vmul.f32 %v1687, 0.5
      %v1691 = vmul.f32 %v1688, 0.5
      %v1692 = vadd.f32 %v1689, 0.5
      %v1693 = vadd.f32 %v1690, 0.5
      %v1694 = vadd.f32 %v1691, 0.5
      %v1695 = vtanh.pop %v1682
      %v1696 = vmul.f32 %v1693, %v1481
      %v1697 = vmul.f32 %v1692, %v1695
      %v1698 = vadd.f32 %v1696, %v1697
      %v1699 = vtanh.pop %v1698
      %v1700 = vmul.f32 %v1694, %v1699
    $region34: #{tpu_custom_call.1} parent=1 // loop_footer
      %s62 = sadd.s32 1, %s58
    $region35: #{tpu_custom_call.1} parent=1 // loop_footer_branch
      %57 = sbr.rel target = $region31
    $region36: #{tpu_custom_call.1} parent=1 // loop_exit
      _
    %v1701 = vld [vmem:[%s2] sm:$0xff]
    %v1702 = vld [vmem:[%s2 + $0x8] sm:$0xff]
    %v1703 = vld [vmem:[%s2 + $0x10] sm:$0xff]
    %v1704 = vld [vmem:[%s2 + $0x18] sm:$0xff]
    %v1705 = vld [vmem:[%s2 + $0x20] sm:$0xff]
    %v1706 = vld [vmem:[%s2 + $0x28] sm:$0xff]
    %v1707 = vld [vmem:[%s2 + $0x30] sm:$0xff]
    %v1708 = vld [vmem:[%s2 + $0x38] sm:$0xff]
    %v1709 = vld [vmem:[%s2 + $0x40] sm:$0xff]
    %v1710 = vld [vmem:[%s2 + $0x48] sm:$0xff]
    %v1711 = vld [vmem:[%s2 + $0x50] sm:$0xff]
    %v1712 = vld [vmem:[%s2 + $0x58] sm:$0xff]
    %v1713 = vld [vmem:[%s2 + $0x60] sm:$0xff]
    %v1714 = vld [vmem:[%s2 + $0x68] sm:$0xff]
    %v1715 = vld [vmem:[%s2 + $0x70] sm:$0xff]
    %v1716 = vld [vmem:[%s2 + $0x78] sm:$0xff]
    %v1717 = vld [vmem:[%s2 + $0x80] sm:$0xff]
    %v1718 = vld [vmem:[%s2 + $0x88] sm:$0xff]
    %v1719 = vld [vmem:[%s2 + $0x90] sm:$0xff]
    %v1720 = vld [vmem:[%s2 + $0x98] sm:$0xff]
    %v1721 = vld [vmem:[%s2 + $0xa0] sm:$0xff]
    %v1722 = vld [vmem:[%s2 + $0xa8] sm:$0xff]
    %v1723 = vld [vmem:[%s2 + $0xb0] sm:$0xff]
    %v1724 = vld [vmem:[%s2 + $0xb8] sm:$0xff]
    %v1725 = vld [vmem:[%s2 + $0xc0] sm:$0xff]
    %v1726 = vld [vmem:[%s2 + $0xc8] sm:$0xff]
    %v1727 = vld [vmem:[%s2 + $0xd0] sm:$0xff]
    %v1728 = vld [vmem:[%s2 + $0xd8] sm:$0xff]
    %v1729 = vld [vmem:[%s2 + $0xe0] sm:$0xff]
    %v1730 = vld [vmem:[%s2 + $0xe8] sm:$0xff]
    %v1731 = vld [vmem:[%s2 + $0xf0] sm:$0xff]
    %v1732 = vld [vmem:[%s2 + $0xf8] sm:$0xff]
    %v1733 = vld [vmem:[#allocation7] sm:$0x1]
    %v1735 = vlaneseq
    %v1736 = vshrl.u32 %v1735, 7
    %v1737 = vsub.s32 0, %v1736
    %v1738 = vrot.slane %v1733, %v1737
    %v1741 = vcombine.high %v63, %v63
    %1743 = vmatprep.subr.mxu0 0.0
    %1744 = vmatpush1.msra.mxu0 %v1701
    %1745 = vmatprep.subr.mxu0 0.0
    %1746 = vmatpush1.msra.mxu0 %v1702
    %1747 = vmatprep.subr.mxu0 0.0
    %1748 = vmatpush1.msra.mxu0 %v1703
    %1749 = vmatprep.subr.mxu0 0.0
    %1750 = vmatpush1.msra.mxu0 %v1704
    %1751 = vmatprep.subr.mxu0 0.0
    %1752 = vmatpush1.msra.mxu0 %v1705
    %1753 = vmatprep.subr.mxu0 0.0
    %1754 = vmatpush1.msra.mxu0 %v1706
    %1755 = vmatprep.subr.mxu0 0.0
    %1756 = vmatpush1.msra.mxu0 %v1707
    %1757 = vmatprep.subr.mxu0 0.0
    %1758 = vmatpush1.msra.mxu0 %v1708
    %1759 = vmatprep.subr.mxu0 0.0
    %1760 = vmatpush1.msra.mxu0 %v1709
    %1761 = vmatprep.subr.mxu0 0.0
    %1762 = vmatpush1.msra.mxu0 %v1710
    %1763 = vmatprep.subr.mxu0 0.0
    %1764 = vmatpush1.msra.mxu0 %v1711
    %1765 = vmatprep.subr.mxu0 0.0
    %1766 = vmatpush1.msra.mxu0 %v1712
    %1767 = vmatprep.subr.mxu0 0.0
    %1768 = vmatpush1.msra.mxu0 %v1713
    %1769 = vmatprep.subr.mxu0 0.0
    %1770 = vmatpush1.msra.mxu0 %v1714
    %1771 = vmatprep.subr.mxu0 0.0
    %1772 = vmatpush1.msra.mxu0 %v1715
    %1773 = vmatprep.subr.mxu0 0.0
    %1774 = vmatpush1.msra.mxu0 %v1716
    %1775 = vmatprep.subr.mxu0 0.0
    %1776 = vmatpush1.msra.mxu0 %v1717
    %1777 = vmatprep.subr.mxu0 0.0
    %1778 = vmatpush1.msra.mxu0 %v1718
    %1779 = vmatprep.subr.mxu0 0.0
    %1780 = vmatpush1.msra.mxu0 %v1719
    %1781 = vmatprep.subr.mxu0 0.0
    %1782 = vmatpush1.msra.mxu0 %v1720
    %1783 = vmatprep.subr.mxu0 0.0
    %1784 = vmatpush1.msra.mxu0 %v1721
    %1785 = vmatprep.subr.mxu0 0.0
    %1786 = vmatpush1.msra.mxu0 %v1722
    %1787 = vmatprep.subr.mxu0 0.0
    %1788 = vmatpush1.msra.mxu0 %v1723
    %1789 = vmatprep.subr.mxu0 0.0
    %1790 = vmatpush1.msra.mxu0 %v1724
    %1791 = vmatprep.subr.mxu0 0.0
    %1792 = vmatpush1.msra.mxu0 %v1725
    %1793 = vmatprep.subr.mxu0 0.0
    %1794 = vmatpush1.msra.mxu0 %v1726
    %1795 = vmatprep.subr.mxu0 0.0
    %1796 = vmatpush1.msra.mxu0 %v1727
    %1797 = vmatprep.subr.mxu0 0.0
    %1798 = vmatpush1.msra.mxu0 %v1728
    %1799 = vmatprep.subr.mxu0 0.0
    %1800 = vmatpush1.msra.mxu0 %v1729
    %1801 = vmatprep.subr.mxu0 0.0
    %1802 = vmatpush1.msra.mxu0 %v1730
    %1803 = vmatprep.subr.mxu0 0.0
    %1804 = vmatpush1.msra.mxu0 %v1731
    %1805 = vmatprep.subr.mxu0 0.0
    %1806 = vmatpush1.msra.mxu0 %v1732
    %1807 = vmatprep.mubr.f32.mxu0 %v1741
    %1808 = vmatmul.mubr.f32.gmra.mrb[0].mxu0 %v63
    %v1809 = vpop.f32.mrb[0].mxu0
    %v1810 = vadd.f32 %v1738, %v1809
    %v1811 = vpop.f32.mrb[0].mxu0
    %1812 = vdwg.mxu0
    %vm1813 = vcmask 19456
    %1814 = vst.msk [vmem:[#allocation8] sm:$0xf] %vm1813, %v1810
    // Predicated region
    $region37: #{tpu_custom_call.1} parent=1 // pred_check
      _
    $region38: #{tpu_custom_call.1} parent=1 // pred_check_branch
      %1816 = sbr.rel (0) target = $region40
    $region39: #{tpu_custom_call.1} parent=1 // pred_region
      %s1818 = ssub.s32 64, 64
      %1819 = vsyncadd [#allocation4], %s1818
      %s1821 = sshll.u32 [#allocation8], 4
      %s1822 = int_to_ptr.vmem [resolvable:$true] %s1821
      %1824 = dma.vmem_to_hbm [thread:$0]  %s1822, 64, %s4, [#allocation4]
    $region40: #{tpu_custom_call.1} parent=1 // pred_fallthru
      _
    // Predicated region
    $region41: #{tpu_custom_call.1} parent=1 // pred_check
      _
    $region42: #{tpu_custom_call.1} parent=1 // pred_check_branch
      %1826 = sbr.rel (0) target = $region44
    $region43: #{tpu_custom_call.1} parent=1 // pred_region
      %1827 = dma.done [#allocation4], 64
    $region44: #{tpu_custom_call.1} parent=1 // pred_fallthru
      _
    %1828 = vsyncpa [#allocation3], 1
    %1829 = vsyncpa [#allocation6], 1
    %1830 = vsyncpa [#allocation4], 1

</llo_original>
